<compile_context>
chip_gen: v7x
topology: tpu7x:2x2x1
jax: 0.10.0
libtpu: 0.0.40
codegen_flags: <defaults>
</compile_context>

<pallas_src>
import jax
import jax.numpy as jnp
from jax import lax
from jax.experimental import pallas as pl
from jax.experimental.pallas import tpu as pltpu


def flowstep_kernel(x_ref, wmix_ref, bmix_ref, m1_ref, b1_ref, m2_ref, b2_ref,
                    o_ref):
    BT, H, WC = x_ref.shape          # block: BT images, H rows, W*C lanes
    M = BT * H                        # matmul M axis = all rows in the block

    x = x_ref[...].reshape(M, WC)     # (BT*H, W*C), lane-dense, layout-free reshape

    # --- fused ActNorm + invertible 1x1 conv: one lane-dense MXU matmul ---
    y = jnp.dot(x.astype(jnp.bfloat16), wmix_ref[...],
                preferred_element_type=jnp.float32) + bmix_ref[...]   # (M, WC) f32

    # --- per-image H shifts: XLU roll + VPU mask (no slice/concat copies) ---
    ridx = lax.broadcasted_iota(jnp.int32, (M, WC), 0)
    rmod = lax.rem(ridx, H)
    top = rmod == 0                   # first row of an image: row h-1 missing
    bot = rmod == H - 1               # last row of an image:  row h+1 missing

    def shift_dn(a):                  # a[m] <- a[m-1], zeroed at image tops
        return jnp.where(top, 0.0, pltpu.roll(a, 1, axis=0))

    def shift_up(a):                  # a[m] <- a[m+1], zeroed at image bottoms
        return jnp.where(bot, 0.0, pltpu.roll(a, M - 1, axis=0))

    yb = y.astype(jnp.bfloat16)
    ydn = shift_dn(y).astype(jnp.bfloat16)
    yup = shift_up(y).astype(jnp.bfloat16)

    # --- coupling conv #1: three ky slabs accumulated in f32 (hidden padded to 128) ---
    h = (jnp.dot(ydn, m1_ref[0], preferred_element_type=jnp.float32)
         + jnp.dot(yb, m1_ref[1], preferred_element_type=jnp.float32)
         + jnp.dot(yup, m1_ref[2], preferred_element_type=jnp.float32)
         + b1_ref[...])
    h = jnp.maximum(h, 0.0)                                   # (M, W*C), padded lanes are 0

    hb = h.astype(jnp.bfloat16)
    hdn = shift_dn(h).astype(jnp.bfloat16)
    hup = shift_up(h).astype(jnp.bfloat16)

    # --- coupling conv #2 (result already scattered into the x2 lanes) ---
    t = (jnp.dot(hdn, m2_ref[0], preferred_element_type=jnp.float32)
         + jnp.dot(hb, m2_ref[1], preferred_element_type=jnp.float32)
         + jnp.dot(hup, m2_ref[2], preferred_element_type=jnp.float32))

    # x1 lanes of t / b2 are zero, so this is: out = [x1, x2 + net(x1)]
    out = y + t + b2_ref[...]
    o_ref[...] = out.reshape(BT, H, WC).astype(o_ref.dtype)


def prepare_params(log_scale, act_bias, winv_pt, w1_pt, b1, w2_pt, b2, W,
                   mxu_dtype=jnp.bfloat16):
    """Fold ActNorm into the 1x1 conv and turn the 3x3 convs into ky band matrices.

    Hidden width is zero-padded from W*Ch to W*C so the intermediate h is a full
    128-lane array (MXU pads N to 128 anyway; this removes masked vregs).
    """
    C = log_scale.shape[0]
    Ch = C // 2

    # ActNorm folded into 1x1:  (x*s + b) @ Wk  ==  x @ (diag(s) Wk) + b @ Wk
    Wk = winv_pt.T                                            # (Cin, Cout)
    w_fused = jnp.exp(log_scale)[:, None] * Wk                # (C, C)
    b_fused = act_bias @ Wk                                   # (C,)
    wmix = jnp.kron(jnp.eye(W, dtype=jnp.float32), w_fused)   # (W*C, W*C) block-diag
    bmix = jnp.tile(b_fused, W).reshape(1, W * C)

    # Width band-selection: S[wi, wo, kx] = 1 iff wi == wo + kx - 1 (SAME pad in W)
    wi = jnp.arange(W)[:, None, None]
    wo = jnp.arange(W)[None, :, None]
    kx = jnp.arange(3)[None, None, :]
    S = (wi == wo + kx - 1).astype(jnp.float32)               # (W, W, 3)

    # conv1: ci padded Ch->C (x2 input channels zeroed), co padded Ch->C (hidden -> 128 lanes)
    w1_t = jnp.transpose(w1_pt, (2, 3, 1, 0))                 # (ky, kx, ci, co)
    w1_f = jnp.pad(w1_t, ((0, 0), (0, 0), (0, C - Ch), (0, C - Ch)))
    m1 = jnp.einsum('abk,ykcd->yacbd', S, w1_f).reshape(3, W * C, W * C)
    b1t = jnp.tile(jnp.concatenate([b1, jnp.zeros((C - Ch,), jnp.float32)]),
                   W).reshape(1, W * C)

    # conv2: ci padded Ch->C (padded hidden lanes are zero), co scattered into the x2 half
    w2_t = jnp.transpose(w2_pt, (2, 3, 1, 0))                 # (ky, kx, ci, co)
    w2_f = jnp.pad(w2_t, ((0, 0), (0, 0), (0, C - Ch), (Ch, 0)))
    m2 = jnp.einsum('abk,ykcd->yacbd', S, w2_f).reshape(3, W * C, W * C)
    b2f = jnp.tile(jnp.concatenate([jnp.zeros((Ch,), jnp.float32), b2]),
                   W).reshape(1, W * C)

    return (wmix.astype(mxu_dtype), bmix, m1.astype(mxu_dtype), b1t,
            m2.astype(mxu_dtype), b2f)


def flowstep_pallas(x_flat, kparams, bt=None):
    """x_flat: (B, H, W*C) float32; kparams from prepare_params."""
    wmix, bmix, m1, b1t, m2, b2f = kparams
    B, H, WC = x_flat.shape

    if bt is None:
        # Keep >= 2 grid steps (feeds both v7x TensorCores) and cap the activation
        # tile (in + out, double-buffered) to ~8 MiB so it fits v7x's scoped VMEM.
        vmem_cap_bt = max(1, (8 << 20) // (H * WC * 4 * 4))
        bt = max(1, min(B // 2 if B >= 2 else 1, vmem_cap_bt))
        while B % bt:
            bt -= 1
    grid = (B // bt,)

    def full(a):
        return pl.BlockSpec(a.shape, lambda b, n=a.ndim: (0,) * n)

    # Advisory cost hint: 1 mix matmul + 3 + 3 conv slabs, all (M x 128 x 128).
    m_total = B * H
    flops = 2 * m_total * WC * WC * 7
    bytes_accessed = int(2 * x_flat.size * 4 +
                         sum(int(p.size) * p.dtype.itemsize for p in kparams))
    cost = pl.CostEstimate(flops=flops, transcendentals=0,
                           bytes_accessed=bytes_accessed)

    return pl.pallas_call(
        flowstep_kernel,
        out_shape=jax.ShapeDtypeStruct((B, H, WC), jnp.float32),
        grid_spec=pltpu.PrefetchScalarGridSpec(
            num_scalar_prefetch=0,
            grid=grid,
            in_specs=[
                pl.BlockSpec((bt, H, WC), lambda b: (b, 0, 0)),  # x (BT images)
                full(wmix),   # fused ActNorm + 1x1 (block-diagonal), bf16
                full(bmix),   # fused bias (1, W*C), f32
                full(m1),     # conv1 ky slabs (3, W*C, W*C), bf16
                full(b1t),    # conv1 bias, tiled+padded (1, W*C), f32
                full(m2),     # conv2 ky slabs (3, W*C, W*C), x2-scattered, bf16
                full(b2f),    # conv2 bias scattered to x2 lanes (1, W*C), f32
            ],
            out_specs=pl.BlockSpec((bt, H, WC), lambda b: (b, 0, 0)),
        ),
        compiler_params=pltpu.CompilerParams(
            dimension_semantics=("parallel",)),   # batch blocks shard across TCs
        cost_estimate=cost,
    )(x_flat, wmix, bmix, m1, b1t, m2, b2f)


if __name__ == "__main__":
    key = jax.random.PRNGKey(0)
    B, C, H, W = 8, 8, 16, 16          # W * C = 128 -> perfectly lane-dense
    Ch = C // 2
    keys = jax.random.split(key, 8)

    # deterministic synthetic parameters (PyTorch layouts)
    x_nchw = jax.random.normal(keys[0], (B, C, H, W), jnp.float32)
    log_scale = 0.1 * jax.random.normal(keys[1], (C,), jnp.float32)
    act_bias = 0.1 * jax.random.normal(keys[2], (C,), jnp.float32)
    winv_pt = jnp.eye(C, dtype=jnp.float32) + \
        0.05 * jax.random.normal(keys[3], (C, C), jnp.float32)       # (Cout, Cin)
    w1_pt = 0.1 * jax.random.normal(keys[4], (Ch, Ch, 3, 3), jnp.float32)
    b1 = 0.1 * jax.random.normal(keys[5], (Ch,), jnp.float32)
    w2_pt = 0.1 * jax.random.normal(keys[6], (Ch, Ch, 3, 3), jnp.float32)
    b2 = 0.1 * jax.random.normal(keys[7], (Ch,), jnp.float32)

    kparams = prepare_params(log_scale, act_bias, winv_pt, w1_pt, b1, w2_pt,
                             b2, W)

    # NCHW -> lane-dense (B, H, W*C)
    x_flat = jnp.transpose(x_nchw, (0, 2, 3, 1)).reshape(B, H, W * C)
    out_flat = flowstep_pallas(x_flat, kparams)
    out_flat = jax.block_until_ready(out_flat)
    out_nchw = jnp.transpose(out_flat.reshape(B, H, W, C), (0, 3, 1, 2))

    # pure-JAX reference with PyTorch (NCHW) semantics
    def ref(x):
        xa = x * jnp.exp(log_scale)[None, :, None, None] \
            + act_bias[None, :, None, None]
        y = jnp.einsum('nchw,oc->nohw', xa, winv_pt)
        x1, x2 = y[:, :Ch], y[:, Ch:]
        dn = ('NCHW', 'OIHW', 'NCHW')
        h = lax.conv_general_dilated(x1, w1_pt, (1, 1), 'SAME',
                                     dimension_numbers=dn) \
            + b1[None, :, None, None]
        h = jnp.maximum(h, 0.0)
        h = lax.conv_general_dilated(h, w2_pt, (1, 1), 'SAME',
                                     dimension_numbers=dn) \
            + b2[None, :, None, None]
        return jnp.concatenate([x1, x2 + h], axis=1)

    expected = ref(x_nchw)
    err = float(jnp.max(jnp.abs(out_nchw - expected)))
    # bf16 MXU inputs (f32 accumulation) -> loosened tolerance vs the f32 reference
    assert jnp.allclose(out_nchw, expected, atol=2e-1, rtol=2e-2), err
    print("KERNEL_OK")
</pallas_src>

<mosaic_0001>
module attributes {stable_mosaic.version = 11 : i64} {
  func.func @flowstep_kernel(%arg0: i32, %arg1: memref<4x16x128xf32, #tpu.memory_space<vmem>>, %arg2: memref<128x128xbf16, #tpu.memory_space<vmem>>, %arg3: memref<1x128xf32, #tpu.memory_space<vmem>>, %arg4: memref<3x128x128xbf16, #tpu.memory_space<vmem>>, %arg5: memref<1x128xf32, #tpu.memory_space<vmem>>, %arg6: memref<3x128x128xbf16, #tpu.memory_space<vmem>>, %arg7: memref<1x128xf32, #tpu.memory_space<vmem>>, %arg8: memref<4x16x128xf32, #tpu.memory_space<vmem>>) attributes {dimension_semantics = [#tpu.dimension_semantics<parallel>], iteration_bounds = array<i64: 2>, scalar_prefetch = 0 : i64, scratch_operands = 0 : i64, tpu.core_type = #tpu.core_type<tc>, window_params = [{transform_indices = @transform_0, window_bounds = array<i64: 4, 16, 128>}, {pipeline_mode = #tpu.pipeline_mode<synchronous>, transform_indices = @transform_1, window_bounds = array<i64: 128, 128>}, {pipeline_mode = #tpu.pipeline_mode<synchronous>, transform_indices = @transform_2, window_bounds = array<i64: 1, 128>}, {pipeline_mode = #tpu.pipeline_mode<synchronous>, transform_indices = @transform_3, window_bounds = array<i64: 3, 128, 128>}, {pipeline_mode = #tpu.pipeline_mode<synchronous>, transform_indices = @transform_4, window_bounds = array<i64: 1, 128>}, {pipeline_mode = #tpu.pipeline_mode<synchronous>, transform_indices = @transform_5, window_bounds = array<i64: 3, 128, 128>}, {pipeline_mode = #tpu.pipeline_mode<synchronous>, transform_indices = @transform_6, window_bounds = array<i64: 1, 128>}, {transform_indices = @transform_7, window_bounds = array<i64: 4, 16, 128>}]} {
    %c0 = arith.constant 0 : index
    %c0_0 = arith.constant 0 : index
    %c0_1 = arith.constant 0 : index
    %0 = vector.load %arg1[%c0, %c0_0, %c0_1] : memref<4x16x128xf32, #tpu.memory_space<vmem>>, vector<4x16x128xf32>
    %1 = vector.shape_cast %0 : vector<4x16x128xf32> to vector<64x128xf32>
    %2 = arith.truncf %1 : vector<64x128xf32> to vector<64x128xbf16>
    %c0_2 = arith.constant 0 : index
    %c0_3 = arith.constant 0 : index
    %3 = vector.load %arg2[%c0_2, %c0_3] : memref<128x128xbf16, #tpu.memory_space<vmem>>, vector<128x128xbf16>
    %cst = arith.constant dense<0.000000e+00> : vector<64x128xf32>
    %4 = tpu.matmul %2, %3, %cst {dimension_numbers = #tpu.dot_dimension_numbers<[1], [0], [0], [1], [0, 0, 1, 1], [], []>} : vector<64x128xbf16>, vector<128x128xbf16>, vector<64x128xf32> -> vector<64x128xf32>
    %c0_4 = arith.constant 0 : index
    %c0_5 = arith.constant 0 : index
    %5 = vector.load %arg3[%c0_4, %c0_5] : memref<1x128xf32, #tpu.memory_space<vmem>>, vector<1x128xf32>
    %6 = vector.broadcast %5 : vector<1x128xf32> to vector<64x128xf32>
    %7 = arith.addf %4, %6 : vector<64x128xf32>
    %8 = tpu.iota {dimensions = array<i32: 0>} : vector<64x128xi32>
    %c16_i32 = arith.constant 16 : i32
    %9 = vector.broadcast %c16_i32 : i32 to vector<64x128xi32>
    %10 = arith.remsi %8, %9 : vector<64x128xi32>
    %c0_i32 = arith.constant 0 : i32
    %11 = vector.broadcast %c0_i32 : i32 to vector<64x128xi32>
    %12 = arith.cmpi eq, %10, %11 : vector<64x128xi32>
    %c15_i32 = arith.constant 15 : i32
    %13 = vector.broadcast %c15_i32 : i32 to vector<64x128xi32>
    %14 = arith.cmpi eq, %10, %13 : vector<64x128xi32>
    %15 = arith.truncf %7 : vector<64x128xf32> to vector<64x128xbf16>
    %c1_i32 = arith.constant 1 : i32
    %16 = tpu.dynamic_rotate %7 by %c1_i32 dim 0 : vector<64x128xf32>, i32 -> vector<64x128xf32>
    %cst_6 = arith.constant 0.000000e+00 : f32
    %17 = vector.broadcast %cst_6 : f32 to vector<64x128xf32>
    %18 = arith.select %12, %17, %16 : vector<64x128xi1>, vector<64x128xf32>
    %19 = arith.truncf %18 : vector<64x128xf32> to vector<64x128xbf16>
    %c63_i32 = arith.constant 63 : i32
    %20 = tpu.dynamic_rotate %7 by %c63_i32 dim 0 : vector<64x128xf32>, i32 -> vector<64x128xf32>
    %cst_7 = arith.constant 0.000000e+00 : f32
    %21 = vector.broadcast %cst_7 : f32 to vector<64x128xf32>
    %22 = arith.select %14, %21, %20 : vector<64x128xi1>, vector<64x128xf32>
    %23 = arith.truncf %22 : vector<64x128xf32> to vector<64x128xbf16>
    %c0_8 = arith.constant 0 : index
    %c0_9 = arith.constant 0 : index
    %c0_10 = arith.constant 0 : index
    %24 = vector.load %arg4[%c0_8, %c0_9, %c0_10] : memref<3x128x128xbf16, #tpu.memory_space<vmem>>, vector<1x128x128xbf16>
    %25 = vector.shape_cast %24 : vector<1x128x128xbf16> to vector<128x128xbf16>
    %cst_11 = arith.constant dense<0.000000e+00> : vector<64x128xf32>
    %26 = tpu.matmul %19, %25, %cst_11 {dimension_numbers = #tpu.dot_dimension_numbers<[1], [0], [0], [1], [0, 0, 1, 1], [], []>} : vector<64x128xbf16>, vector<128x128xbf16>, vector<64x128xf32> -> vector<64x128xf32>
    %c1 = arith.constant 1 : index
    %c0_12 = arith.constant 0 : index
    %c0_13 = arith.constant 0 : index
    %27 = vector.load %arg4[%c1, %c0_12, %c0_13] : memref<3x128x128xbf16, #tpu.memory_space<vmem>>, vector<1x128x128xbf16>
    %28 = vector.shape_cast %27 : vector<1x128x128xbf16> to vector<128x128xbf16>
    %cst_14 = arith.constant dense<0.000000e+00> : vector<64x128xf32>
    %29 = tpu.matmul %15, %28, %cst_14 {dimension_numbers = #tpu.dot_dimension_numbers<[1], [0], [0], [1], [0, 0, 1, 1], [], []>} : vector<64x128xbf16>, vector<128x128xbf16>, vector<64x128xf32> -> vector<64x128xf32>
    %30 = arith.addf %26, %29 : vector<64x128xf32>
    %c2 = arith.constant 2 : index
    %c0_15 = arith.constant 0 : index
    %c0_16 = arith.constant 0 : index
    %31 = vector.load %arg4[%c2, %c0_15, %c0_16] : memref<3x128x128xbf16, #tpu.memory_space<vmem>>, vector<1x128x128xbf16>
    %32 = vector.shape_cast %31 : vector<1x128x128xbf16> to vector<128x128xbf16>
    %cst_17 = arith.constant dense<0.000000e+00> : vector<64x128xf32>
    %33 = tpu.matmul %23, %32, %cst_17 {dimension_numbers = #tpu.dot_dimension_numbers<[1], [0], [0], [1], [0, 0, 1, 1], [], []>} : vector<64x128xbf16>, vector<128x128xbf16>, vector<64x128xf32> -> vector<64x128xf32>
    %34 = arith.addf %30, %33 : vector<64x128xf32>
    %c0_18 = arith.constant 0 : index
    %c0_19 = arith.constant 0 : index
    %35 = vector.load %arg5[%c0_18, %c0_19] : memref<1x128xf32, #tpu.memory_space<vmem>>, vector<1x128xf32>
    %36 = vector.broadcast %35 : vector<1x128xf32> to vector<64x128xf32>
    %37 = arith.addf %34, %36 : vector<64x128xf32>
    %cst_20 = arith.constant 0.000000e+00 : f32
    %38 = vector.broadcast %cst_20 : f32 to vector<64x128xf32>
    %39 = arith.maximumf %37, %38 : vector<64x128xf32>
    %40 = arith.truncf %39 : vector<64x128xf32> to vector<64x128xbf16>
    %c1_i32_21 = arith.constant 1 : i32
    %41 = tpu.dynamic_rotate %39 by %c1_i32_21 dim 0 : vector<64x128xf32>, i32 -> vector<64x128xf32>
    %cst_22 = arith.constant 0.000000e+00 : f32
    %42 = vector.broadcast %cst_22 : f32 to vector<64x128xf32>
    %43 = arith.select %12, %42, %41 : vector<64x128xi1>, vector<64x128xf32>
    %44 = arith.truncf %43 : vector<64x128xf32> to vector<64x128xbf16>
    %c63_i32_23 = arith.constant 63 : i32
    %45 = tpu.dynamic_rotate %39 by %c63_i32_23 dim 0 : vector<64x128xf32>, i32 -> vector<64x128xf32>
    %cst_24 = arith.constant 0.000000e+00 : f32
    %46 = vector.broadcast %cst_24 : f32 to vector<64x128xf32>
    %47 = arith.select %14, %46, %45 : vector<64x128xi1>, vector<64x128xf32>
    %48 = arith.truncf %47 : vector<64x128xf32> to vector<64x128xbf16>
    %c0_25 = arith.constant 0 : index
    %c0_26 = arith.constant 0 : index
    %c0_27 = arith.constant 0 : index
    %49 = vector.load %arg6[%c0_25, %c0_26, %c0_27] : memref<3x128x128xbf16, #tpu.memory_space<vmem>>, vector<1x128x128xbf16>
    %50 = vector.shape_cast %49 : vector<1x128x128xbf16> to vector<128x128xbf16>
    %cst_28 = arith.constant dense<0.000000e+00> : vector<64x128xf32>
    %51 = tpu.matmul %44, %50, %cst_28 {dimension_numbers = #tpu.dot_dimension_numbers<[1], [0], [0], [1], [0, 0, 1, 1], [], []>} : vector<64x128xbf16>, vector<128x128xbf16>, vector<64x128xf32> -> vector<64x128xf32>
    %c1_29 = arith.constant 1 : index
    %c0_30 = arith.constant 0 : index
    %c0_31 = arith.constant 0 : index
    %52 = vector.load %arg6[%c1_29, %c0_30, %c0_31] : memref<3x128x128xbf16, #tpu.memory_space<vmem>>, vector<1x128x128xbf16>
    %53 = vector.shape_cast %52 : vector<1x128x128xbf16> to vector<128x128xbf16>
    %cst_32 = arith.constant dense<0.000000e+00> : vector<64x128xf32>
    %54 = tpu.matmul %40, %53, %cst_32 {dimension_numbers = #tpu.dot_dimension_numbers<[1], [0], [0], [1], [0, 0, 1, 1], [], []>} : vector<64x128xbf16>, vector<128x128xbf16>, vector<64x128xf32> -> vector<64x128xf32>
    %55 = arith.addf %51, %54 : vector<64x128xf32>
    %c2_33 = arith.constant 2 : index
    %c0_34 = arith.constant 0 : index
    %c0_35 = arith.constant 0 : index
    %56 = vector.load %arg6[%c2_33, %c0_34, %c0_35] : memref<3x128x128xbf16, #tpu.memory_space<vmem>>, vector<1x128x128xbf16>
    %57 = vector.shape_cast %56 : vector<1x128x128xbf16> to vector<128x128xbf16>
    %cst_36 = arith.constant dense<0.000000e+00> : vector<64x128xf32>
    %58 = tpu.matmul %48, %57, %cst_36 {dimension_numbers = #tpu.dot_dimension_numbers<[1], [0], [0], [1], [0, 0, 1, 1], [], []>} : vector<64x128xbf16>, vector<128x128xbf16>, vector<64x128xf32> -> vector<64x128xf32>
    %59 = arith.addf %55, %58 : vector<64x128xf32>
    %60 = arith.addf %7, %59 : vector<64x128xf32>
    %c0_37 = arith.constant 0 : index
    %c0_38 = arith.constant 0 : index
    %61 = vector.load %arg7[%c0_37, %c0_38] : memref<1x128xf32, #tpu.memory_space<vmem>>, vector<1x128xf32>
    %62 = vector.broadcast %61 : vector<1x128xf32> to vector<64x128xf32>
    %63 = arith.addf %60, %62 : vector<64x128xf32>
    %64 = vector.shape_cast %63 : vector<64x128xf32> to vector<4x16x128xf32>
    %c0_39 = arith.constant 0 : index
    %c0_40 = arith.constant 0 : index
    %c0_41 = arith.constant 0 : index
    %65 = vector.load %arg8[%c0_39, %c0_40, %c0_41] : memref<4x16x128xf32, #tpu.memory_space<vmem>>, vector<4x16x128xf32>
    tpu.vector_store %arg8[%c0_39, %c0_40, %c0_41], %64 {strides = array<i32>} : memref<4x16x128xf32, #tpu.memory_space<vmem>>, vector<4x16x128xf32>,
    return
  }
  func.func @transform_0(%arg0: i32) -> (i32, i32, i32) {
    %c0_i32 = arith.constant 0 : i32
    %c0_i32_0 = arith.constant 0 : i32
    %c0_i32_1 = arith.constant 0 : i32
    return %arg0, %c0_i32, %c0_i32_0 : i32, i32, i32
  }
  func.func @transform_1(%arg0: i32) -> (i32, i32) {
    %c0_i32 = arith.constant 0 : i32
    %c0_i32_0 = arith.constant 0 : i32
    %c0_i32_1 = arith.constant 0 : i32
    return %c0_i32, %c0_i32_0 : i32, i32
  }
  func.func @transform_2(%arg0: i32) -> (i32, i32) {
    %c0_i32 = arith.constant 0 : i32
    %c0_i32_0 = arith.constant 0 : i32
    %c0_i32_1 = arith.constant 0 : i32
    return %c0_i32, %c0_i32_0 : i32, i32
  }
  func.func @transform_3(%arg0: i32) -> (i32, i32, i32) {
    %c0_i32 = arith.constant 0 : i32
    %c0_i32_0 = arith.constant 0 : i32
    %c0_i32_1 = arith.constant 0 : i32
    %c0_i32_2 = arith.constant 0 : i32
    return %c0_i32, %c0_i32_0, %c0_i32_1 : i32, i32, i32
  }
  func.func @transform_4(%arg0: i32) -> (i32, i32) {
    %c0_i32 = arith.constant 0 : i32
    %c0_i32_0 = arith.constant 0 : i32
    %c0_i32_1 = arith.constant 0 : i32
    return %c0_i32, %c0_i32_0 : i32, i32
  }
  func.func @transform_5(%arg0: i32) -> (i32, i32, i32) {
    %c0_i32 = arith.constant 0 : i32
    %c0_i32_0 = arith.constant 0 : i32
    %c0_i32_1 = arith.constant 0 : i32
    %c0_i32_2 = arith.constant 0 : i32
    return %c0_i32, %c0_i32_0, %c0_i32_1 : i32, i32, i32
  }
  func.func @transform_6(%arg0: i32) -> (i32, i32) {
    %c0_i32 = arith.constant 0 : i32
    %c0_i32_0 = arith.constant 0 : i32
    %c0_i32_1 = arith.constant 0 : i32
    return %c0_i32, %c0_i32_0 : i32, i32
  }
  func.func @transform_7(%arg0: i32) -> (i32, i32, i32) {
    %c0_i32 = arith.constant 0 : i32
    %c0_i32_0 = arith.constant 0 : i32
    %c0_i32_1 = arith.constant 0 : i32
    return %arg0, %c0_i32, %c0_i32_0 : i32, i32, i32
  }
}

</mosaic_0001>

<llo_original>
// kernel: tpu_custom_call.1
$region0: #{tpu_custom_call.1}
  #allocation0 [shape = 'u32[]', space=smem, size = 0x4, offset = 0x4, fixed_abs, tag = 'smem constant byte address 0x4 - core index']
  #allocation1 [shape = 'u32[144,128]{1,0:T(1,128)}', space=vmem, size = 0x12000, scoped, tag = 'internal scratch']
  %s0 = inlined_call_operand.hbm [shape: f32[8,16,128], index: 0, kind: input, shape index: {}]
  %s1 = inlined_call_operand.hbm [shape: bf16[128,128], index: 1, kind: input, shape index: {}]
  %s2 = inlined_call_operand.vmem [shape: f32[1,128], index: 2, kind: input, shape index: {}]
  %s3 = inlined_call_operand.hbm [shape: bf16[3,128,128], index: 3, kind: input, shape index: {}]
  %s4 = inlined_call_operand.vmem [shape: f32[1,128], index: 4, kind: input, shape index: {}]
  %s5 = inlined_call_operand.hbm [shape: bf16[3,128,128], index: 5, kind: input, shape index: {}]
  %s6 = inlined_call_operand.vmem [shape: f32[1,128], index: 6, kind: input, shape index: {}]
  %s7 = inlined_call_operand.hbm [shape: f32[8,16,128], index: 7, kind: output, shape index: {}]
  %s8 = sld [smem:[#allocation0]]
  $region77: #{tpu_custom_call.1} parent=0
    _
  %s10 = ssub.s32 1, %s8
  %s11 = scalar_select 0, %s10, %s8
  $region1: #{tpu_custom_call.1} parent=0
    #allocation2 [shape = 'u8[65536]{0}', space=vmem, size = 0x10000, scoped, tag = 'input window, operand 0']
    #allocation3 [shape = 's32[2]{0}', space=sflag, size = 0x8, scoped, tag = 'scoped memory for tpu_custom_call.1']
    #allocation4 [shape = 's32[2]{0}', space=sflag, size = 0x8, scoped, tag = 'scoped memory for tpu_custom_call.1']
    #allocation5 [shape = 'u8[32768]{0}', space=vmem, size = 0x8000, scoped, tag = 'input window, operand 1, single buffered']
    #allocation6 [shape = 's32[1]{0}', space=sflag, size = 0x4, scoped, tag = 'scoped memory for tpu_custom_call.1']
    #allocation7 [shape = 'u8[98304]{0}', space=vmem, size = 0x18000, scoped, tag = 'input window, operand 3, single buffered']
    #allocation8 [shape = 'u8[98304]{0}', space=vmem, size = 0x18000, scoped, tag = 'input window, operand 5, single buffered']
    #allocation9 [shape = 's32[1]{0}', space=sflag, size = 0x4, scoped, tag = 'scoped memory for tpu_custom_call.1']
    #allocation10 [shape = 'u8[65536]{0}', space=vmem, size = 0x10000, scoped, tag = 'output window, operand 0']
    %12 = vsyncpa [#allocation3], 0
    %s13 = scalar_lea.sflag [#allocation3], 1
    %14 = vsyncpa %s13, 0
    %15 = vsyncpa [#allocation6], 0
    %16 = vsyncpa [#allocation9], 0
    %17 = vsyncpa [#allocation4], 0
    %s18 = scalar_lea.sflag [#allocation4], 1
    %19 = vsyncpa %s18, 0
    loop: start=0, step=1, limit=4
    $region2: #{tpu_custom_call.1} parent=1 // loop_pre_header
      _
    $region3: #{tpu_custom_call.1} parent=1 // loop_header
      %s21 = sphi 0, %s25
      %p22 = scmp.ge.s32.totalorder %s21, 4
      %s31 = sphi 0, %s33
      %s34 = sphi 0, %s31
      %s35 = sphi 0, %s34
      %s51 = sphi 0, %s35
      %s55 = sphi 0, %s55
      %s57 = sphi 0, %s55
      %s58 = sphi 0, %s57
      %s72 = sphi 0, %s58
      %s76 = sphi 0, %s76
      %s78 = sphi 0, %s76
      %s79 = sphi 0, %s78
      %s93 = sphi 0, %s79
      %s97 = sphi 0, %s97
      %s99 = sphi 0, %s97
      %s100 = sphi 0, %s99
      %s114 = sphi 0, %s100
      %s118 = sphi 0, %s118
      %s120 = sphi 0, %s118
      %s121 = sphi 0, %s120
      %s135 = sphi 0, %s121
      %s139 = sphi 0, %s139
      %s141 = sphi 0, %s139
      %s142 = sphi 0, %s141
      %s156 = sphi 0, %s142
      %s160 = sphi 0, %s160
      %s162 = sphi 0, %s160
      %s163 = sphi 0, %s162
      %s177 = sphi 0, %s163
      %s183 = sphi 0, %s185
      %s186 = sphi 0, %s183
      %s187 = sphi 0, %s186
      %s203 = sphi 0, %s187
    $region4: #{tpu_custom_call.1} parent=1 // loop_header_branch
      %24 = sbr.rel (%p22) target = $region8
    $region5: #{tpu_custom_call.1} parent=1 // loop_body
      %s26 = ssub.s32 %s21, 1
      %s27 = ssub.s32 %s21, 2
      %s28 = sadd.s32 %s21, 1
      %s29 = ssub.s32 %s21, %s28
      %p30 = scmp.eq.s32.totalorder %s29, 0
      %s32 = sadd.s32 %s31, 1
      %s33 = scalar_select %p30, %s31, %s32
      %p36 = pneg %p30
      %p37 = scmp.eq.s32.totalorder %s21, 1
      %p38 = por %p36, %p37
      %p39 = scmp.ne.s32.totalorder %s31, %s34
      %p40 = scmp.eq.s32.totalorder %s21, 0
      %p41 = por %p39, %p40
      %p42 = scmp.ne.s32.totalorder %s31, %s34
      %p43 = scmp.eq.s32.totalorder %s26, 1
      %p44 = por %p42, %p43
      %p45 = scmp.ne.s32.totalorder %s34, %s35
      %p46 = scmp.eq.s32.totalorder %s26, 0
      %p47 = por %p45, %p46
      %p48 = scmp.ne.s32.totalorder %s34, %s35
      %p49 = scmp.eq.s32.totalorder %s27, 1
      %p50 = por %p48, %p49
      %p52 = scmp.ne.s32.totalorder %s35, %s51
      %p53 = scmp.eq.s32.totalorder %s27, 0
      %p54 = por %p52, %p53
      %s56 = sadd.s32 %s55, 1
      %p59 = scmp.eq.s32.totalorder %s21, 1
      %p60 = scmp.ne.s32.totalorder %s55, %s57
      %p61 = scmp.eq.s32.totalorder %s21, 0
      %p62 = por %p60, %p61
      %p63 = scmp.ne.s32.totalorder %s55, %s57
      %p64 = scmp.eq.s32.totalorder %s26, 1
      %p65 = por %p63, %p64
      %p66 = scmp.ne.s32.totalorder %s57, %s58
      %p67 = scmp.eq.s32.totalorder %s26, 0
      %p68 = por %p66, %p67
      %p69 = scmp.ne.s32.totalorder %s57, %s58
      %p70 = scmp.eq.s32.totalorder %s27, 1
      %p71 = por %p69, %p70
      %p73 = scmp.ne.s32.totalorder %s58, %s72
      %p74 = scmp.eq.s32.totalorder %s27, 0
      %p75 = por %p73, %p74
      %s77 = sadd.s32 %s76, 1
      %p80 = scmp.eq.s32.totalorder %s21, 1
      %p81 = scmp.ne.s32.totalorder %s76, %s78
      %p82 = scmp.eq.s32.totalorder %s21, 0
      %p83 = por %p81, %p82
      %p84 = scmp.ne.s32.totalorder %s76, %s78
      %p85 = scmp.eq.s32.totalorder %s26, 1
      %p86 = por %p84, %p85
      %p87 = scmp.ne.s32.totalorder %s78, %s79
      %p88 = scmp.eq.s32.totalorder %s26, 0
      %p89 = por %p87, %p88
      %p90 = scmp.ne.s32.totalorder %s78, %s79
      %p91 = scmp.eq.s32.totalorder %s27, 1
      %p92 = por %p90, %p91
      %p94 = scmp.ne.s32.totalorder %s79, %s93
      %p95 = scmp.eq.s32.totalorder %s27, 0
      %p96 = por %p94, %p95
      %s98 = sadd.s32 %s97, 1
      %p101 = scmp.eq.s32.totalorder %s21, 1
      %p102 = scmp.ne.s32.totalorder %s97, %s99
      %p103 = scmp.eq.s32.totalorder %s21, 0
      %p104 = por %p102, %p103
      %p105 = scmp.ne.s32.totalorder %s97, %s99
      %p106 = scmp.eq.s32.totalorder %s26, 1
      %p107 = por %p105, %p106
      %p108 = scmp.ne.s32.totalorder %s99, %s100
      %p109 = scmp.eq.s32.totalorder %s26, 0
      %p110 = por %p108, %p109
      %p111 = scmp.ne.s32.totalorder %s99, %s100
      %p112 = scmp.eq.s32.totalorder %s27, 1
      %p113 = por %p111, %p112
      %p115 = scmp.ne.s32.totalorder %s100, %s114
      %p116 = scmp.eq.s32.totalorder %s27, 0
      %p117 = por %p115, %p116
      %s119 = sadd.s32 %s118, 1
      %p122 = scmp.eq.s32.totalorder %s21, 1
      %p123 = scmp.ne.s32.totalorder %s118, %s120
      %p124 = scmp.eq.s32.totalorder %s21, 0
      %p125 = por %p123, %p124
      %p126 = scmp.ne.s32.totalorder %s118, %s120
      %p127 = scmp.eq.s32.totalorder %s26, 1
      %p128 = por %p126, %p127
      %p129 = scmp.ne.s32.totalorder %s120, %s121
      %p130 = scmp.eq.s32.totalorder %s26, 0
      %p131 = por %p129, %p130
      %p132 = scmp.ne.s32.totalorder %s120, %s121
      %p133 = scmp.eq.s32.totalorder %s27, 1
      %p134 = por %p132, %p133
      %p136 = scmp.ne.s32.totalorder %s121, %s135
      %p137 = scmp.eq.s32.totalorder %s27, 0
      %p138 = por %p136, %p137
      %s140 = sadd.s32 %s139, 1
      %p143 = scmp.eq.s32.totalorder %s21, 1
      %p144 = scmp.ne.s32.totalorder %s139, %s141
      %p145 = scmp.eq.s32.totalorder %s21, 0
      %p146 = por %p144, %p145
      %p147 = scmp.ne.s32.totalorder %s139, %s141
      %p148 = scmp.eq.s32.totalorder %s26, 1
      %p149 = por %p147, %p148
      %p150 = scmp.ne.s32.totalorder %s141, %s142
      %p151 = scmp.eq.s32.totalorder %s26, 0
      %p152 = por %p150, %p151
      %p153 = scmp.ne.s32.totalorder %s141, %s142
      %p154 = scmp.eq.s32.totalorder %s27, 1
      %p155 = por %p153, %p154
      %p157 = scmp.ne.s32.totalorder %s142, %s156
      %p158 = scmp.eq.s32.totalorder %s27, 0
      %p159 = por %p157, %p158
      %s161 = sadd.s32 %s160, 1
      %p164 = scmp.eq.s32.totalorder %s21, 1
      %p165 = scmp.ne.s32.totalorder %s160, %s162
      %p166 = scmp.eq.s32.totalorder %s21, 0
      %p167 = por %p165, %p166
      %p168 = scmp.ne.s32.totalorder %s160, %s162
      %p169 = scmp.eq.s32.totalorder %s26, 1
      %p170 = por %p168, %p169
      %p171 = scmp.ne.s32.totalorder %s162, %s163
      %p172 = scmp.eq.s32.totalorder %s26, 0
      %p173 = por %p171, %p172
      %p174 = scmp.ne.s32.totalorder %s162, %s163
      %p175 = scmp.eq.s32.totalorder %s27, 1
      %p176 = por %p174, %p175
      %p178 = scmp.ne.s32.totalorder %s163, %s177
      %p179 = scmp.eq.s32.totalorder %s27, 0
      %p180 = por %p178, %p179
      %s181 = ssub.s32 %s21, %s28
      %p182 = scmp.eq.s32.totalorder %s181, 0
      %s184 = sadd.s32 %s183, 1
      %s185 = scalar_select %p182, %s183, %s184
      %p188 = pneg %p182
      %p189 = scmp.eq.s32.totalorder %s21, 1
      %p190 = por %p188, %p189
      %p191 = scmp.ne.s32.totalorder %s183, %s186
      %p192 = scmp.eq.s32.totalorder %s21, 0
      %p193 = por %p191, %p192
      %p194 = scmp.ne.s32.totalorder %s183, %s186
      %p195 = scmp.eq.s32.totalorder %s26, 1
      %p196 = por %p194, %p195
      %p197 = scmp.ne.s32.totalorder %s186, %s187
      %p198 = scmp.eq.s32.totalorder %s26, 0
      %p199 = por %p197, %p198
      %p200 = scmp.ne.s32.totalorder %s186, %s187
      %p201 = scmp.eq.s32.totalorder %s27, 1
      %p202 = por %p200, %p201
      %p204 = scmp.ne.s32.totalorder %s187, %s203
      %p205 = scmp.eq.s32.totalorder %s27, 0
      %p206 = por %p204, %p205
      %p207 = scmp.le.s32.totalorder 1, %s21
      %p208 = scmp.lt.s32.totalorder %s21, 3
      %p209 = pnand %p207, %p208
      %p210 = pneg %p209
      // Predicated region
      $region9: #{tpu_custom_call.1} parent=5 // pred_check
        _
      $region10: #{tpu_custom_call.1} parent=5 // pred_check_branch
        %212 = sbr.rel (%p209) target = $region12
      $region11: #{tpu_custom_call.1} parent=5 // pred_region
        %s213 = ssub.s32 %s21, 1
        // Predicated region
        $region13: #{tpu_custom_call.1} parent=11 // pred_check
          %p214 = pneg %p68
        $region14: #{tpu_custom_call.1} parent=11 // pred_check_branch
          %216 = sbr.rel (%p214) target = $region16
        $region15: #{tpu_custom_call.1} parent=11 // pred_region
          %s218 = ssub.s32 1024, 1024
          %219 = vsyncadd [#allocation6], %s218
          %s220 = sshll.u32 [#allocation5], 4
          %s221 = int_to_ptr.vmem [resolvable:$true] %s220
          %226 = dma.hbm_to_vmem [thread:$0]  %s1, 1024, %s221, [#allocation6], 64, 64, 4
        $region16: #{tpu_custom_call.1} parent=11 // pred_fallthru
          _
        // Predicated region
        $region17: #{tpu_custom_call.1} parent=11 // pred_check
          %p227 = pneg %p89
        $region18: #{tpu_custom_call.1} parent=11 // pred_check_branch
          %229 = sbr.rel (%p227) target = $region20
        $region19: #{tpu_custom_call.1} parent=11 // pred_region
          _
        $region20: #{tpu_custom_call.1} parent=11 // pred_fallthru
          _
        // Predicated region
        $region21: #{tpu_custom_call.1} parent=11 // pred_check
          %p230 = pneg %p110
        $region22: #{tpu_custom_call.1} parent=11 // pred_check_branch
          %232 = sbr.rel (%p230) target = $region24
        $region23: #{tpu_custom_call.1} parent=11 // pred_region
          %s234 = ssub.s32 3072, 3072
          %235 = vsyncadd [#allocation6], %s234
          %s236 = sshll.u32 [#allocation7], 4
          %s237 = int_to_ptr.vmem [resolvable:$true] %s236
          %242 = dma.hbm_to_vmem [thread:$0]  %s3, 3072, %s237, [#allocation6], 64, 64, 4
        $region24: #{tpu_custom_call.1} parent=11 // pred_fallthru
          _
        // Predicated region
        $region25: #{tpu_custom_call.1} parent=11 // pred_check
          %p243 = pneg %p131
        $region26: #{tpu_custom_call.1} parent=11 // pred_check_branch
          %245 = sbr.rel (%p243) target = $region28
        $region27: #{tpu_custom_call.1} parent=11 // pred_region
          _
        $region28: #{tpu_custom_call.1} parent=11 // pred_fallthru
          _
        // Predicated region
        $region29: #{tpu_custom_call.1} parent=11 // pred_check
          %p246 = pneg %p152
        $region30: #{tpu_custom_call.1} parent=11 // pred_check_branch
          %248 = sbr.rel (%p246) target = $region32
        $region31: #{tpu_custom_call.1} parent=11 // pred_region
          %s250 = ssub.s32 3072, 3072
          %251 = vsyncadd [#allocation9], %s250
          %s252 = sshll.u32 [#allocation8], 4
          %s253 = int_to_ptr.vmem [resolvable:$true] %s252
          %258 = dma.hbm_to_vmem [thread:$0]  %s5, 3072, %s253, [#allocation9], 64, 64, 4
        $region32: #{tpu_custom_call.1} parent=11 // pred_fallthru
          _
        // Predicated region
        $region33: #{tpu_custom_call.1} parent=11 // pred_check
          %p259 = pneg %p173
        $region34: #{tpu_custom_call.1} parent=11 // pred_check_branch
          %261 = sbr.rel (%p259) target = $region36
        $region35: #{tpu_custom_call.1} parent=11 // pred_region
          _
        $region36: #{tpu_custom_call.1} parent=11 // pred_fallthru
          _
      $region12: #{tpu_custom_call.1} parent=5 // pred_fallthru
        _
      %p262 = scmp.lt.s32.totalorder %s21, 2
      // Predicated region
      $region37: #{tpu_custom_call.1} parent=5 // pred_check
        %p263 = pneg %p262
      $region38: #{tpu_custom_call.1} parent=5 // pred_check_branch
        %265 = sbr.rel (%p263) target = $region40
      $region39: #{tpu_custom_call.1} parent=5 // pred_region
        // Predicated region
        $region41: #{tpu_custom_call.1} parent=39 // pred_check
          %p266 = pneg %p41
        $region42: #{tpu_custom_call.1} parent=39 // pred_check_branch
          %268 = sbr.rel (%p266) target = $region44
        $region43: #{tpu_custom_call.1} parent=39 // pred_region
          %s269 = sand.u32 %s31, 1
          %s270 = scalar_lea.sflag [#allocation3], %s269
          %s271 = sand.u32 %s31, 1
          %s272 = smul.addr %s271, 64
          %s273 = scalar_lea.vmem [#allocation2], %s272
          %s274 = smul.u32 4, %s21
          %s276 = ssub.s32 1024, 1024
          %277 = vsyncadd %s270, %s276
          %s278 = smul.addr %s274, 2
          %s279 = smul.addr %s278, 128
          %s280 = scalar_lea.hbm %s0, %s279
          %s281 = sshll.u32 %s273, 4
          %s282 = int_to_ptr.vmem [resolvable:$true] %s281
          %287 = dma.hbm_to_vmem [thread:$0]  %s280, 1024, %s282, %s270, 128, 128, 8
        $region44: #{tpu_custom_call.1} parent=39 // pred_fallthru
          _
      $region40: #{tpu_custom_call.1} parent=5 // pred_fallthru
        _
      %p288 = scmp.le.s32.totalorder 1, %s21
      %p289 = scmp.lt.s32.totalorder %s21, 3
      %p290 = pnand %p288, %p289
      %p291 = pneg %p290
      // Predicated region
      $region45: #{tpu_custom_call.1} parent=5 // pred_check
        _
      $region46: #{tpu_custom_call.1} parent=5 // pred_check_branch
        %293 = sbr.rel (%p290) target = $region48
      $region47: #{tpu_custom_call.1} parent=5 // pred_region
        %s294 = ssub.s32 %s21, 1
        %s295 = sand.u32 %s34, 1
        %s296 = scalar_lea.sflag [#allocation3], %s295
        %s297 = sand.u32 %s34, 1
        %s298 = smul.addr %s297, 64
        %s299 = scalar_lea.vmem [#allocation2], %s298
        // Predicated region
        $region49: #{tpu_custom_call.1} parent=47 // pred_check
          %p300 = pneg %p47
        $region50: #{tpu_custom_call.1} parent=47 // pred_check_branch
          %302 = sbr.rel (%p300) target = $region52
        $region51: #{tpu_custom_call.1} parent=47 // pred_region
          %303 = dma.done %s296, 1024
        $region52: #{tpu_custom_call.1} parent=47 // pred_fallthru
          _
        // Predicated region
        $region53: #{tpu_custom_call.1} parent=47 // pred_check
          %p304 = pneg %p68
        $region54: #{tpu_custom_call.1} parent=47 // pred_check_branch
          %306 = sbr.rel (%p304) target = $region56
        $region55: #{tpu_custom_call.1} parent=47 // pred_region
          %307 = dma.done [#allocation6], 1024
        $region56: #{tpu_custom_call.1} parent=47 // pred_fallthru
          _
        // Predicated region
        $region57: #{tpu_custom_call.1} parent=47 // pred_check
          %p308 = pneg %p110
        $region58: #{tpu_custom_call.1} parent=47 // pred_check_branch
          %310 = sbr.rel (%p308) target = $region60
        $region59: #{tpu_custom_call.1} parent=47 // pred_region
          %311 = dma.done [#allocation6], 3072
        $region60: #{tpu_custom_call.1} parent=47 // pred_fallthru
          _
        // Predicated region
        $region61: #{tpu_custom_call.1} parent=47 // pred_check
          %p312 = pneg %p152
        $region62: #{tpu_custom_call.1} parent=47 // pred_check_branch
          %314 = sbr.rel (%p312) target = $region64
        $region63: #{tpu_custom_call.1} parent=47 // pred_region
          %315 = dma.done [#allocation9], 3072
        $region64: #{tpu_custom_call.1} parent=47 // pred_fallthru
          _
        %s316 = sand.u32 %s34, 1
        %s317 = scalar_lea.sflag [#allocation3], %s316
        %s318 = sand.u32 %s34, 1
        %s319 = smul.addr %s318, 64
        %s320 = scalar_lea.vmem [#allocation2], %s319
        %p321 = pneg %p47
        %p322 = pneg %p44
        %p323 = pneg %p68
        %p324 = pneg %p65
        %p325 = pneg %p89
        %p326 = pneg %p86
        %p327 = pneg %p110
        %p328 = pneg %p107
        %p329 = pneg %p131
        %p330 = pneg %p128
        %p331 = pneg %p152
        %p332 = pneg %p149
        %p333 = pneg %p173
        %p334 = pneg %p170
        %p335 = pneg %p199
        %p336 = pneg %p196
        %s337 = sand.u32 %s186, 1
        %s338 = scalar_lea.sflag [#allocation4], %s337
        %s339 = sand.u32 %s186, 1
        %s340 = smul.addr %s339, 64
        %s341 = scalar_lea.vmem [#allocation10], %s340
        %s342 = smul.u32 4, %s26
        %s343 = smul.u32 4, %s26
        %v345 = vld [vmem:[%s299] sm:$0xff]
        %v346 = vld [vmem:[%s299 + $0x8] sm:$0xff]
        %v347 = vld [vmem:[%s299 + $0x10] sm:$0xff]
        %v348 = vld [vmem:[%s299 + $0x18] sm:$0xff]
        %v349 = vld [vmem:[%s299 + $0x20] sm:$0xff]
        %v350 = vld [vmem:[%s299 + $0x28] sm:$0xff]
        %v351 = vld [vmem:[%s299 + $0x30] sm:$0xff]
        %v352 = vld [vmem:[%s299 + $0x38] sm:$0xff]
        %v353 = vpack.c.bf16 %v346, %v345
        %v354 = vpack.c.bf16 %v348, %v347
        %v355 = vpack.c.bf16 %v350, %v349
        %v356 = vpack.c.bf16 %v352, %v351
        %v357 = vld [vmem:[#allocation5] sm:$0xf]
        %v358 = vld [vmem:[#allocation5 + $0x4] sm:$0xf]
        %v359 = vld [vmem:[#allocation5 + $0x8] sm:$0xf]
        %v360 = vld [vmem:[#allocation5 + $0xc] sm:$0xf]
        %v361 = vld [vmem:[#allocation5 + $0x10] sm:$0xf]
        %v362 = vld [vmem:[#allocation5 + $0x14] sm:$0xf]
        %v363 = vld [vmem:[#allocation5 + $0x18] sm:$0xf]
        %v364 = vld [vmem:[#allocation5 + $0x1c] sm:$0xf]
        %v365 = vld [vmem:[#allocation5 + $0x20] sm:$0xf]
        %v366 = vld [vmem:[#allocation5 + $0x24] sm:$0xf]
        %v367 = vld [vmem:[#allocation5 + $0x28] sm:$0xf]
        %v368 = vld [vmem:[#allocation5 + $0x2c] sm:$0xf]
        %v369 = vld [vmem:[#allocation5 + $0x30] sm:$0xf]
        %v370 = vld [vmem:[#allocation5 + $0x34] sm:$0xf]
        %v371 = vld [vmem:[#allocation5 + $0x38] sm:$0xf]
        %v372 = vld [vmem:[#allocation5 + $0x3c] sm:$0xf]
        %v373 = vld [vmem:[%s2] sm:$0x1]
        %v375 = vlaneseq
        %v376 = vshrl.u32 %v375, 7
        %v377 = vsub.s32 0, %v376
        %v378 = vrot.slane %v373, %v377
        %v396 = vunpack.c.l.b16 %v357
        %v397 = vunpack.c.l.b16 %v358
        %v398 = vunpack.c.l.b16 %v359
        %v399 = vunpack.c.l.b16 %v360
        %v400 = vunpack.c.l.b16 %v361
        %v401 = vunpack.c.l.b16 %v362
        %v402 = vunpack.c.l.b16 %v363
        %v403 = vunpack.c.l.b16 %v364
        %v404 = vunpack.c.l.b16 %v365
        %v405 = vunpack.c.l.b16 %v366
        %v406 = vunpack.c.l.b16 %v367
        %v407 = vunpack.c.l.b16 %v368
        %v408 = vunpack.c.l.b16 %v369
        %v409 = vunpack.c.l.b16 %v370
        %v410 = vunpack.c.l.b16 %v371
        %v411 = vunpack.c.l.b16 %v372
        %v412 = vpack.c.b16 %v397, %v396
        %v413 = vpack.c.b16 %v399, %v398
        %v414 = vpack.c.b16 %v401, %v400
        %v415 = vpack.c.b16 %v403, %v402
        %v416 = vpack.c.b16 %v405, %v404
        %v417 = vpack.c.b16 %v407, %v406
        %v418 = vpack.c.b16 %v409, %v408
        %v419 = vpack.c.b16 %v411, %v410
        %428 = vmatprep.subr.bf16.mxu0 0
        %429 = vmatpush1.bf16.msra.mxu0 %v412
        %430 = vmatprep.subr.bf16.mxu0 0
        %431 = vmatpush1.bf16.msra.mxu0 %v413
        %432 = vmatprep.subr.bf16.mxu0 0
        %433 = vmatpush1.bf16.msra.mxu0 %v414
        %434 = vmatprep.subr.bf16.mxu0 0
        %435 = vmatpush1.bf16.msra.mxu0 %v415
        %436 = vmatprep.subr.bf16.mxu0 0
        %437 = vmatpush1.bf16.msra.mxu0 %v416
        %438 = vmatprep.subr.bf16.mxu0 0
        %439 = vmatpush1.bf16.msra.mxu0 %v417
        %440 = vmatprep.subr.bf16.mxu0 0
        %441 = vmatpush1.bf16.msra.mxu0 %v418
        %442 = vmatprep.subr.bf16.mxu0 0
        %443 = vmatpush1.bf16.msra.mxu0 %v419
        %444 = vmatprep.subr.bf16.mxu0 0
        %445 = vmatpush1.bf16.msra.mxu0 0
        %446 = vmatprep.subr.bf16.mxu0 0
        %447 = vmatpush1.bf16.msra.mxu0 0
        %448 = vmatprep.subr.bf16.mxu0 0
        %449 = vmatpush1.bf16.msra.mxu0 0
        %450 = vmatprep.subr.bf16.mxu0 0
        %451 = vmatpush1.bf16.msra.mxu0 0
        %452 = vmatprep.subr.bf16.mxu0 0
        %453 = vmatpush1.bf16.msra.mxu0 0
        %454 = vmatprep.subr.bf16.mxu0 0
        %455 = vmatpush1.bf16.msra.mxu0 0
        %456 = vmatprep.subr.bf16.mxu0 0
        %457 = vmatpush1.bf16.msra.mxu0 0
        %458 = vmatprep.subr.bf16.mxu0 0
        %459 = vmatpush1.bf16.msra.mxu0 0
        %460 = vmatprep.mubr.bf16.mxu0 0
        %461 = vmatmul.mubr.bf16.gmra.mrb[0].mxu0 %v353
        %v462 = vpop.f32.mrb[0].mxu0
        %v463 = vadd.f32 %v378, %v462
        %v464 = vpop.f32.mrb[0].mxu0
        %v465 = vpop.f32.mrb[0].mxu0
        %v466 = vadd.f32 %v378, %v465
        %v467 = vpop.f32.mrb[0].mxu0
        %468 = vmatprep.mubr.bf16.mxu0 0
        %469 = vmatmul.mubr.bf16.gmra.mrb[0].mxu0 %v354
        %v470 = vpop.f32.mrb[0].mxu0
        %v471 = vadd.f32 %v378, %v470
        %v472 = vpop.f32.mrb[0].mxu0
        %v473 = vpop.f32.mrb[0].mxu0
        %v474 = vadd.f32 %v378, %v473
        %v475 = vpop.f32.mrb[0].mxu0
        %476 = vmatprep.mubr.bf16.mxu0 0
        %477 = vmatmul.mubr.bf16.gmra.mrb[0].mxu0 %v355
        %v478 = vpop.f32.mrb[0].mxu0
        %v479 = vadd.f32 %v378, %v478
        %v480 = vpop.f32.mrb[0].mxu0
        %v481 = vpop.f32.mrb[0].mxu0
        %v482 = vadd.f32 %v378, %v481
        %v483 = vpop.f32.mrb[0].mxu0
        %484 = vmatprep.mubr.bf16.mxu0 0
        %485 = vmatmul.mubr.bf16.gmra.mrb[0].mxu0 %v356
        %v486 = vpop.f32.mrb[0].mxu0
        %v487 = vadd.f32 %v378, %v486
        %v488 = vpop.f32.mrb[0].mxu0
        %v489 = vpop.f32.mrb[0].mxu0
        %v490 = vadd.f32 %v378, %v489
        %v491 = vpop.f32.mrb[0].mxu0
        %492 = vdwg.mxu0
        %v493 = vlaneseq
        %v494 = vshrl.u32 %v493, 7
        %v495 = vadd.s32 %v494, 8
        %v496 = vadd.s32 %v494, 16
        %v497 = vadd.s32 %v494, 24
        %v498 = vadd.s32 %v494, 32
        %v499 = vadd.s32 %v494, 40
        %v500 = vadd.s32 %v494, 48
        %v501 = vadd.s32 %v494, 56
        %vm502 = vcmp.lt.s32.totalorder %v494, 0
        %v503 = vsub.s32 0, %v494
        %v504 = vsel %vm502, %v503, %v494
        %v505 = vshrl.u32 %v504, 4
        %v506 = vand.u32 %v504, 15
        %v507 = vsub.s32 0, %v506
        %v508 = vsel %vm502, %v507, %v506
        %vm509 = vcmp.lt.s32.totalorder %v495, 0
        %v510 = vsub.s32 0, %v495
        %v511 = vsel %vm509, %v510, %v495
        %v512 = vshrl.u32 %v511, 4
        %v513 = vand.u32 %v511, 15
        %v514 = vsub.s32 0, %v513
        %v515 = vsel %vm509, %v514, %v513
        %vm516 = vcmp.lt.s32.totalorder %v496, 0
        %v517 = vsub.s32 0, %v496
        %v518 = vsel %vm516, %v517, %v496
        %v519 = vshrl.u32 %v518, 4
        %v520 = vand.u32 %v518, 15
        %v521 = vsub.s32 0, %v520
        %v522 = vsel %vm516, %v521, %v520
        %vm523 = vcmp.lt.s32.totalorder %v497, 0
        %v524 = vsub.s32 0, %v497
        %v525 = vsel %vm523, %v524, %v497
        %v526 = vshrl.u32 %v525, 4
        %v527 = vand.u32 %v525, 15
        %v528 = vsub.s32 0, %v527
        %v529 = vsel %vm523, %v528, %v527
        %vm530 = vcmp.lt.s32.totalorder %v498, 0
        %v531 = vsub.s32 0, %v498
        %v532 = vsel %vm530, %v531, %v498
        %v533 = vshrl.u32 %v532, 4
        %v534 = vand.u32 %v532, 15
        %v535 = vsub.s32 0, %v534
        %v536 = vsel %vm530, %v535, %v534
        %vm537 = vcmp.lt.s32.totalorder %v499, 0
        %v538 = vsub.s32 0, %v499
        %v539 = vsel %vm537, %v538, %v499
        %v540 = vshrl.u32 %v539, 4
        %v541 = vand.u32 %v539, 15
        %v542 = vsub.s32 0, %v541
        %v543 = vsel %vm537, %v542, %v541
        %vm544 = vcmp.lt.s32.totalorder %v500, 0
        %v545 = vsub.s32 0, %v500
        %v546 = vsel %vm544, %v545, %v500
        %v547 = vshrl.u32 %v546, 4
        %v548 = vand.u32 %v546, 15
        %v549 = vsub.s32 0, %v548
        %v550 = vsel %vm544, %v549, %v548
        %vm551 = vcmp.lt.s32.totalorder %v501, 0
        %v552 = vsub.s32 0, %v501
        %v553 = vsel %vm551, %v552, %v501
        %v554 = vshrl.u32 %v553, 4
        %v555 = vand.u32 %v553, 15
        %v556 = vsub.s32 0, %v555
        %v557 = vsel %vm551, %v556, %v555
        %vm558 = vcmp.eq.s32.totalorder %v508, 0
        %vm559 = vcmp.eq.s32.totalorder %v515, 0
        %vm560 = vcmp.eq.s32.totalorder %v522, 0
        %vm561 = vcmp.eq.s32.totalorder %v529, 0
        %vm562 = vcmp.eq.s32.totalorder %v536, 0
        %vm563 = vcmp.eq.s32.totalorder %v543, 0
        %vm564 = vcmp.eq.s32.totalorder %v550, 0
        %vm565 = vcmp.eq.s32.totalorder %v557, 0
        %vm566 = vcmp.eq.s32.totalorder %v508, 15
        %vm567 = vcmp.eq.s32.totalorder %v515, 15
        %vm568 = vcmp.eq.s32.totalorder %v522, 15
        %vm569 = vcmp.eq.s32.totalorder %v529, 15
        %vm570 = vcmp.eq.s32.totalorder %v536, 15
        %vm571 = vcmp.eq.s32.totalorder %v543, 15
        %vm572 = vcmp.eq.s32.totalorder %v550, 15
        %vm573 = vcmp.eq.s32.totalorder %v557, 15
        %v574 = vpack.c.bf16 %v466, %v463
        %v575 = vpack.c.bf16 %v474, %v471
        %v576 = vpack.c.bf16 %v482, %v479
        %v577 = vpack.c.bf16 %v490, %v487
        %v578 = vrot.slane %v463, 7
        %v579 = vrot.slane %v466, 7
        %v580 = vrot.slane %v471, 7
        %v581 = vrot.slane %v474, 7
        %v582 = vrot.slane %v479, 7
        %v583 = vrot.slane %v482, 7
        %v584 = vrot.slane %v487, 7
        %v585 = vrot.slane %v490, 7
        %vm586 = vcmp.lt.s32.totalorder %v494, 1
        %v587 = vsel %vm586, %v584, %v585
        %v588 = vsel %vm586, %v583, %v584
        %v589 = vsel %vm586, %v582, %v583
        %v590 = vsel %vm586, %v581, %v582
        %v591 = vsel %vm586, %v580, %v581
        %v592 = vsel %vm586, %v579, %v580
        %v593 = vsel %vm586, %v578, %v579
        %v594 = vsel %vm586, %v585, %v578
        %v595 = vsel %vm558, 0.0, %v594
        %v596 = vsel %vm559, 0.0, %v593
        %v597 = vsel %vm560, 0.0, %v592
        %v598 = vsel %vm561, 0.0, %v591
        %v599 = vsel %vm562, 0.0, %v590
        %v600 = vsel %vm563, 0.0, %v589
        %v601 = vsel %vm564, 0.0, %v588
        %v602 = vsel %vm565, 0.0, %v587
        %v603 = vpack.c.bf16 %v596, %v595
        %v604 = vpack.c.bf16 %v598, %v597
        %v605 = vpack.c.bf16 %v600, %v599
        %v606 = vpack.c.bf16 %v602, %v601
        %v607 = vrot.slane %v463, 1
        %v608 = vrot.slane %v466, 1
        %v609 = vrot.slane %v471, 1
        %v610 = vrot.slane %v474, 1
        %v611 = vrot.slane %v479, 1
        %v612 = vrot.slane %v482, 1
        %v613 = vrot.slane %v487, 1
        %v614 = vrot.slane %v490, 1
        %vm615 = vcmp.lt.s32.totalorder %v494, 7
        %v616 = vsel %vm615, %v613, %v614
        %v617 = vsel %vm615, %v612, %v613
        %v618 = vsel %vm615, %v611, %v612
        %v619 = vsel %vm615, %v610, %v611
        %v620 = vsel %vm615, %v609, %v610
        %v621 = vsel %vm615, %v608, %v609
        %v622 = vsel %vm615, %v607, %v608
        %v623 = vsel %vm615, %v614, %v607
        %v624 = vsel %vm566, 0.0, %v622
        %v625 = vsel %vm567, 0.0, %v621
        %v626 = vsel %vm568, 0.0, %v620
        %v627 = vsel %vm569, 0.0, %v619
        %v628 = vsel %vm570, 0.0, %v618
        %v629 = vsel %vm571, 0.0, %v617
        %v630 = vsel %vm572, 0.0, %v616
        %v631 = vsel %vm573, 0.0, %v623
        %v632 = vpack.c.bf16 %v625, %v624
        %v633 = vpack.c.bf16 %v627, %v626
        %v634 = vpack.c.bf16 %v629, %v628
        %v635 = vpack.c.bf16 %v631, %v630
        %v636 = vld [vmem:[#allocation7] sm:$0xf]
        %v637 = vld [vmem:[#allocation7 + $0x4] sm:$0xf]
        %v638 = vld [vmem:[#allocation7 + $0x8] sm:$0xf]
        %v639 = vld [vmem:[#allocation7 + $0xc] sm:$0xf]
        %v640 = vld [vmem:[#allocation7 + $0x10] sm:$0xf]
        %v641 = vld [vmem:[#allocation7 + $0x14] sm:$0xf]
        %v642 = vld [vmem:[#allocation7 + $0x18] sm:$0xf]
        %v643 = vld [vmem:[#allocation7 + $0x1c] sm:$0xf]
        %v644 = vld [vmem:[#allocation7 + $0x20] sm:$0xf]
        %v645 = vld [vmem:[#allocation7 + $0x24] sm:$0xf]
        %v646 = vld [vmem:[#allocation7 + $0x28] sm:$0xf]
        %v647 = vld [vmem:[#allocation7 + $0x2c] sm:$0xf]
        %v648 = vld [vmem:[#allocation7 + $0x30] sm:$0xf]
        %v649 = vld [vmem:[#allocation7 + $0x34] sm:$0xf]
        %v650 = vld [vmem:[#allocation7 + $0x38] sm:$0xf]
        %v651 = vld [vmem:[#allocation7 + $0x3c] sm:$0xf]
        %s652 = scalar_lea.vmem [#allocation7], 64
        %v653 = vld [vmem:[%s652] sm:$0xf]
        %v654 = vld [vmem:[%s652 + $0x4] sm:$0xf]
        %v655 = vld [vmem:[%s652 + $0x8] sm:$0xf]
        %v656 = vld [vmem:[%s652 + $0xc] sm:$0xf]
        %v657 = vld [vmem:[%s652 + $0x10] sm:$0xf]
        %v658 = vld [vmem:[%s652 + $0x14] sm:$0xf]
        %v659 = vld [vmem:[%s652 + $0x18] sm:$0xf]
        %v660 = vld [vmem:[%s652 + $0x1c] sm:$0xf]
        %v661 = vld [vmem:[%s652 + $0x20] sm:$0xf]
        %v662 = vld [vmem:[%s652 + $0x24] sm:$0xf]
        %v663 = vld [vmem:[%s652 + $0x28] sm:$0xf]
        %v664 = vld [vmem:[%s652 + $0x2c] sm:$0xf]
        %v665 = vld [vmem:[%s652 + $0x30] sm:$0xf]
        %v666 = vld [vmem:[%s652 + $0x34] sm:$0xf]
        %v667 = vld [vmem:[%s652 + $0x38] sm:$0xf]
        %v668 = vld [vmem:[%s652 + $0x3c] sm:$0xf]
        %v685 = vunpack.c.l.b16 %v653
        %v686 = vunpack.c.l.b16 %v654
        %v687 = vunpack.c.l.b16 %v655
        %v688 = vunpack.c.l.b16 %v656
        %v689 = vunpack.c.l.b16 %v657
        %v690 = vunpack.c.l.b16 %v658
        %v691 = vunpack.c.l.b16 %v659
        %v692 = vunpack.c.l.b16 %v660
        %v693 = vunpack.c.l.b16 %v661
        %v694 = vunpack.c.l.b16 %v662
        %v695 = vunpack.c.l.b16 %v663
        %v696 = vunpack.c.l.b16 %v664
        %v697 = vunpack.c.l.b16 %v665
        %v698 = vunpack.c.l.b16 %v666
        %v699 = vunpack.c.l.b16 %v667
        %v700 = vunpack.c.l.b16 %v668
        %v701 = vpack.c.b16 %v686, %v685
        %v702 = vpack.c.b16 %v688, %v687
        %v703 = vpack.c.b16 %v690, %v689
        %v704 = vpack.c.b16 %v692, %v691
        %v705 = vpack.c.b16 %v694, %v693
        %v706 = vpack.c.b16 %v696, %v695
        %v707 = vpack.c.b16 %v698, %v697
        %v708 = vpack.c.b16 %v700, %v699
        %717 = vmatprep.subr.bf16.mxu0 0
        %718 = vmatpush1.bf16.msra.mxu0 %v701
        %719 = vmatprep.subr.bf16.mxu0 0
        %720 = vmatpush1.bf16.msra.mxu0 %v702
        %721 = vmatprep.subr.bf16.mxu0 0
        %722 = vmatpush1.bf16.msra.mxu0 %v703
        %723 = vmatprep.subr.bf16.mxu0 0
        %724 = vmatpush1.bf16.msra.mxu0 %v704
        %725 = vmatprep.subr.bf16.mxu0 0
        %726 = vmatpush1.bf16.msra.mxu0 %v705
        %727 = vmatprep.subr.bf16.mxu0 0
        %728 = vmatpush1.bf16.msra.mxu0 %v706
        %729 = vmatprep.subr.bf16.mxu0 0
        %730 = vmatpush1.bf16.msra.mxu0 %v707
        %731 = vmatprep.subr.bf16.mxu0 0
        %732 = vmatpush1.bf16.msra.mxu0 %v708
        %733 = vmatprep.subr.bf16.mxu0 0
        %734 = vmatpush1.bf16.msra.mxu0 0
        %735 = vmatprep.subr.bf16.mxu0 0
        %736 = vmatpush1.bf16.msra.mxu0 0
        %737 = vmatprep.subr.bf16.mxu0 0
        %738 = vmatpush1.bf16.msra.mxu0 0
        %739 = vmatprep.subr.bf16.mxu0 0
        %740 = vmatpush1.bf16.msra.mxu0 0
        %741 = vmatprep.subr.bf16.mxu0 0
        %742 = vmatpush1.bf16.msra.mxu0 0
        %743 = vmatprep.subr.bf16.mxu0 0
        %744 = vmatpush1.bf16.msra.mxu0 0
        %745 = vmatprep.subr.bf16.mxu0 0
        %746 = vmatpush1.bf16.msra.mxu0 0
        %747 = vmatprep.subr.bf16.mxu0 0
        %748 = vmatpush1.bf16.msra.mxu0 0
        %749 = vmatprep.mubr.bf16.mxu0 0
        %750 = vmatmul.mubr.bf16.gmra.mrb[0].mxu0 %v574
        %v751 = vpop.f32.mrb[0].mxu0
        %v752 = vadd.f32 0.0, %v751
        %v753 = vpop.f32.mrb[0].mxu0
        %v754 = vpop.f32.mrb[0].mxu0
        %v755 = vadd.f32 0.0, %v754
        %v756 = vpop.f32.mrb[0].mxu0
        %757 = vmatprep.mubr.bf16.mxu0 0
        %758 = vmatmul.mubr.bf16.gmra.mrb[0].mxu0 %v575
        %v759 = vpop.f32.mrb[0].mxu0
        %v760 = vadd.f32 0.0, %v759
        %v761 = vpop.f32.mrb[0].mxu0
        %v762 = vpop.f32.mrb[0].mxu0
        %v763 = vadd.f32 0.0, %v762
        %v764 = vpop.f32.mrb[0].mxu0
        %765 = vmatprep.mubr.bf16.mxu0 0
        %766 = vmatmul.mubr.bf16.gmra.mrb[0].mxu0 %v576
        %v767 = vpop.f32.mrb[0].mxu0
        %v768 = vadd.f32 0.0, %v767
        %v769 = vpop.f32.mrb[0].mxu0
        %v770 = vpop.f32.mrb[0].mxu0
        %v771 = vadd.f32 0.0, %v770
        %v772 = vpop.f32.mrb[0].mxu0
        %773 = vmatprep.mubr.bf16.mxu0 0
        %774 = vmatmul.mubr.bf16.gmra.mrb[0].mxu0 %v577
        %v775 = vpop.f32.mrb[0].mxu0
        %v776 = vadd.f32 0.0, %v775
        %v777 = vpop.f32.mrb[0].mxu0
        %v778 = vpop.f32.mrb[0].mxu0
        %v779 = vadd.f32 0.0, %v778
        %v780 = vpop.f32.mrb[0].mxu0
        %781 = vdwg.mxu0
        %v798 = vunpack.c.l.b16 %v636
        %v799 = vunpack.c.l.b16 %v637
        %v800 = vunpack.c.l.b16 %v638
        %v801 = vunpack.c.l.b16 %v639
        %v802 = vunpack.c.l.b16 %v640
        %v803 = vunpack.c.l.b16 %v641
        %v804 = vunpack.c.l.b16 %v642
        %v805 = vunpack.c.l.b16 %v643
        %v806 = vunpack.c.l.b16 %v644
        %v807 = vunpack.c.l.b16 %v645
        %v808 = vunpack.c.l.b16 %v646
        %v809 = vunpack.c.l.b16 %v647
        %v810 = vunpack.c.l.b16 %v648
        %v811 = vunpack.c.l.b16 %v649
        %v812 = vunpack.c.l.b16 %v650
        %v813 = vunpack.c.l.b16 %v651
        %v814 = vpack.c.b16 %v799, %v798
        %v815 = vpack.c.b16 %v801, %v800
        %v816 = vpack.c.b16 %v803, %v802
        %v817 = vpack.c.b16 %v805, %v804
        %v818 = vpack.c.b16 %v807, %v806
        %v819 = vpack.c.b16 %v809, %v808
        %v820 = vpack.c.b16 %v811, %v810
        %v821 = vpack.c.b16 %v813, %v812
        %830 = vmatprep.subr.bf16.mxu0 0
        %831 = vmatpush1.bf16.msra.mxu0 %v814
        %832 = vmatprep.subr.bf16.mxu0 0
        %833 = vmatpush1.bf16.msra.mxu0 %v815
        %834 = vmatprep.subr.bf16.mxu0 0
        %835 = vmatpush1.bf16.msra.mxu0 %v816
        %836 = vmatprep.subr.bf16.mxu0 0
        %837 = vmatpush1.bf16.msra.mxu0 %v817
        %838 = vmatprep.subr.bf16.mxu0 0
        %839 = vmatpush1.bf16.msra.mxu0 %v818
        %840 = vmatprep.subr.bf16.mxu0 0
        %841 = vmatpush1.bf16.msra.mxu0 %v819
        %842 = vmatprep.subr.bf16.mxu0 0
        %843 = vmatpush1.bf16.msra.mxu0 %v820
        %844 = vmatprep.subr.bf16.mxu0 0
        %845 = vmatpush1.bf16.msra.mxu0 %v821
        %846 = vmatprep.subr.bf16.mxu0 0
        %847 = vmatpush1.bf16.msra.mxu0 0
        %848 = vmatprep.subr.bf16.mxu0 0
        %849 = vmatpush1.bf16.msra.mxu0 0
        %850 = vmatprep.subr.bf16.mxu0 0
        %851 = vmatpush1.bf16.msra.mxu0 0
        %852 = vmatprep.subr.bf16.mxu0 0
        %853 = vmatpush1.bf16.msra.mxu0 0
        %854 = vmatprep.subr.bf16.mxu0 0
        %855 = vmatpush1.bf16.msra.mxu0 0
        %856 = vmatprep.subr.bf16.mxu0 0
        %857 = vmatpush1.bf16.msra.mxu0 0
        %858 = vmatprep.subr.bf16.mxu0 0
        %859 = vmatpush1.bf16.msra.mxu0 0
        %860 = vmatprep.subr.bf16.mxu0 0
        %861 = vmatpush1.bf16.msra.mxu0 0
        %862 = vmatprep.mubr.bf16.mxu0 0
        %863 = vmatmul.mubr.bf16.gmra.mrb[0].mxu0 %v603
        %v864 = vpop.f32.mrb[0].mxu0
        %v865 = vadd.f32 %v752, %v864
        %v866 = vpop.f32.mrb[0].mxu0
        %v867 = vpop.f32.mrb[0].mxu0
        %v868 = vadd.f32 %v755, %v867
        %v869 = vpop.f32.mrb[0].mxu0
        %870 = vmatprep.mubr.bf16.mxu0 0
        %871 = vmatmul.mubr.bf16.gmra.mrb[0].mxu0 %v604
        %v872 = vpop.f32.mrb[0].mxu0
        %v873 = vadd.f32 %v760, %v872
        %v874 = vpop.f32.mrb[0].mxu0
        %v875 = vpop.f32.mrb[0].mxu0
        %v876 = vadd.f32 %v763, %v875
        %v877 = vpop.f32.mrb[0].mxu0
        %878 = vmatprep.mubr.bf16.mxu0 0
        %879 = vmatmul.mubr.bf16.gmra.mrb[0].mxu0 %v605
        %v880 = vpop.f32.mrb[0].mxu0
        %v881 = vadd.f32 %v768, %v880
        %v882 = vpop.f32.mrb[0].mxu0
        %v883 = vpop.f32.mrb[0].mxu0
        %v884 = vadd.f32 %v771, %v883
        %v885 = vpop.f32.mrb[0].mxu0
        %886 = vmatprep.mubr.bf16.mxu0 0
        %887 = vmatmul.mubr.bf16.gmra.mrb[0].mxu0 %v606
        %v888 = vpop.f32.mrb[0].mxu0
        %v889 = vadd.f32 %v776, %v888
        %v890 = vpop.f32.mrb[0].mxu0
        %v891 = vpop.f32.mrb[0].mxu0
        %v892 = vadd.f32 %v779, %v891
        %v893 = vpop.f32.mrb[0].mxu0
        %894 = vdwg.mxu0
        %s895 = scalar_lea.vmem [#allocation7], 128
        %v896 = vld [vmem:[%s895] sm:$0xf]
        %v897 = vld [vmem:[%s895 + $0x4] sm:$0xf]
        %v898 = vld [vmem:[%s895 + $0x8] sm:$0xf]
        %v899 = vld [vmem:[%s895 + $0xc] sm:$0xf]
        %v900 = vld [vmem:[%s895 + $0x10] sm:$0xf]
        %v901 = vld [vmem:[%s895 + $0x14] sm:$0xf]
        %v902 = vld [vmem:[%s895 + $0x18] sm:$0xf]
        %v903 = vld [vmem:[%s895 + $0x1c] sm:$0xf]
        %v904 = vld [vmem:[%s895 + $0x20] sm:$0xf]
        %v905 = vld [vmem:[%s895 + $0x24] sm:$0xf]
        %v906 = vld [vmem:[%s895 + $0x28] sm:$0xf]
        %v907 = vld [vmem:[%s895 + $0x2c] sm:$0xf]
        %v908 = vld [vmem:[%s895 + $0x30] sm:$0xf]
        %v909 = vld [vmem:[%s895 + $0x34] sm:$0xf]
        %v910 = vld [vmem:[%s895 + $0x38] sm:$0xf]
        %v911 = vld [vmem:[%s895 + $0x3c] sm:$0xf]
        %v928 = vunpack.c.l.b16 %v896
        %v929 = vunpack.c.l.b16 %v897
        %v930 = vunpack.c.l.b16 %v898
        %v931 = vunpack.c.l.b16 %v899
        %v932 = vunpack.c.l.b16 %v900
        %v933 = vunpack.c.l.b16 %v901
        %v934 = vunpack.c.l.b16 %v902
        %v935 = vunpack.c.l.b16 %v903
        %v936 = vunpack.c.l.b16 %v904
        %v937 = vunpack.c.l.b16 %v905
        %v938 = vunpack.c.l.b16 %v906
        %v939 = vunpack.c.l.b16 %v907
        %v940 = vunpack.c.l.b16 %v908
        %v941 = vunpack.c.l.b16 %v909
        %v942 = vunpack.c.l.b16 %v910
        %v943 = vunpack.c.l.b16 %v911
        %v944 = vpack.c.b16 %v929, %v928
        %v945 = vpack.c.b16 %v931, %v930
        %v946 = vpack.c.b16 %v933, %v932
        %v947 = vpack.c.b16 %v935, %v934
        %v948 = vpack.c.b16 %v937, %v936
        %v949 = vpack.c.b16 %v939, %v938
        %v950 = vpack.c.b16 %v941, %v940
        %v951 = vpack.c.b16 %v943, %v942
        %960 = vmatprep.subr.bf16.mxu0 0
        %961 = vmatpush1.bf16.msra.mxu0 %v944
        %962 = vmatprep.subr.bf16.mxu0 0
        %963 = vmatpush1.bf16.msra.mxu0 %v945
        %964 = vmatprep.subr.bf16.mxu0 0
        %965 = vmatpush1.bf16.msra.mxu0 %v946
        %966 = vmatprep.subr.bf16.mxu0 0
        %967 = vmatpush1.bf16.msra.mxu0 %v947
        %968 = vmatprep.subr.bf16.mxu0 0
        %969 = vmatpush1.bf16.msra.mxu0 %v948
        %970 = vmatprep.subr.bf16.mxu0 0
        %971 = vmatpush1.bf16.msra.mxu0 %v949
        %972 = vmatprep.subr.bf16.mxu0 0
        %973 = vmatpush1.bf16.msra.mxu0 %v950
        %974 = vmatprep.subr.bf16.mxu0 0
        %975 = vmatpush1.bf16.msra.mxu0 %v951
        %976 = vmatprep.subr.bf16.mxu0 0
        %977 = vmatpush1.bf16.msra.mxu0 0
        %978 = vmatprep.subr.bf16.mxu0 0
        %979 = vmatpush1.bf16.msra.mxu0 0
        %980 = vmatprep.subr.bf16.mxu0 0
        %981 = vmatpush1.bf16.msra.mxu0 0
        %982 = vmatprep.subr.bf16.mxu0 0
        %983 = vmatpush1.bf16.msra.mxu0 0
        %984 = vmatprep.subr.bf16.mxu0 0
        %985 = vmatpush1.bf16.msra.mxu0 0
        %986 = vmatprep.subr.bf16.mxu0 0
        %987 = vmatpush1.bf16.msra.mxu0 0
        %988 = vmatprep.subr.bf16.mxu0 0
        %989 = vmatpush1.bf16.msra.mxu0 0
        %990 = vmatprep.subr.bf16.mxu0 0
        %991 = vmatpush1.bf16.msra.mxu0 0
        %992 = vmatprep.mubr.bf16.mxu0 0
        %993 = vmatmul.mubr.bf16.gmra.mrb[0].mxu0 %v632
        %v994 = vpop.f32.mrb[0].mxu0
        %v995 = vadd.f32 0.0, %v994
        %v996 = vpop.f32.mrb[0].mxu0
        %v997 = vpop.f32.mrb[0].mxu0
        %v998 = vadd.f32 0.0, %v997
        %v999 = vpop.f32.mrb[0].mxu0
        %1000 = vmatprep.mubr.bf16.mxu0 0
        %1001 = vmatmul.mubr.bf16.gmra.mrb[0].mxu0 %v633
        %v1002 = vpop.f32.mrb[0].mxu0
        %v1003 = vadd.f32 0.0, %v1002
        %v1004 = vpop.f32.mrb[0].mxu0
        %v1005 = vpop.f32.mrb[0].mxu0
        %v1006 = vadd.f32 0.0, %v1005
        %v1007 = vpop.f32.mrb[0].mxu0
        %1008 = vmatprep.mubr.bf16.mxu0 0
        %1009 = vmatmul.mubr.bf16.gmra.mrb[0].mxu0 %v634
        %v1010 = vpop.f32.mrb[0].mxu0
        %v1011 = vadd.f32 0.0, %v1010
        %v1012 = vpop.f32.mrb[0].mxu0
        %v1013 = vpop.f32.mrb[0].mxu0
        %v1014 = vadd.f32 0.0, %v1013
        %v1015 = vpop.f32.mrb[0].mxu0
        %1016 = vmatprep.mubr.bf16.mxu0 0
        %1017 = vmatmul.mubr.bf16.gmra.mrb[0].mxu0 %v635
        %v1018 = vpop.f32.mrb[0].mxu0
        %v1019 = vadd.f32 0.0, %v1018
        %v1020 = vpop.f32.mrb[0].mxu0
        %v1021 = vpop.f32.mrb[0].mxu0
        %v1022 = vadd.f32 0.0, %v1021
        %v1023 = vpop.f32.mrb[0].mxu0
        %1024 = vdwg.mxu0
        %v1025 = vadd.f32 %v865, %v995
        %v1026 = vadd.f32 %v868, %v998
        %v1027 = vadd.f32 %v873, %v1003
        %v1028 = vadd.f32 %v876, %v1006
        %v1029 = vadd.f32 %v881, %v1011
        %v1030 = vadd.f32 %v884, %v1014
        %v1031 = vadd.f32 %v889, %v1019
        %v1032 = vadd.f32 %v892, %v1022
        %v1033 = vld [vmem:[%s4] sm:$0x1]
        %v1035 = vlaneseq
        %v1036 = vshrl.u32 %v1035, 7
        %v1037 = vsub.s32 0, %v1036
        %v1038 = vrot.slane %v1033, %v1037
        %v1040 = vadd.f32 %v1025, %v1038
        %v1041 = vadd.f32 %v1026, %v1038
        %v1042 = vadd.f32 %v1027, %v1038
        %v1043 = vadd.f32 %v1028, %v1038
        %v1044 = vadd.f32 %v1029, %v1038
        %v1045 = vadd.f32 %v1030, %v1038
        %v1046 = vadd.f32 %v1031, %v1038
        %v1047 = vadd.f32 %v1032, %v1038
        %v1048 = vmax.f32 %v1040, 0.0
        %v1049 = vmax.f32 %v1041, 0.0
        %v1050 = vmax.f32 %v1042, 0.0
        %v1051 = vmax.f32 %v1043, 0.0
        %v1052 = vmax.f32 %v1044, 0.0
        %v1053 = vmax.f32 %v1045, 0.0
        %v1054 = vmax.f32 %v1046, 0.0
        %v1055 = vmax.f32 %v1047, 0.0
        %v1056 = vpack.c.bf16 %v1049, %v1048
        %v1057 = vpack.c.bf16 %v1051, %v1050
        %v1058 = vpack.c.bf16 %v1053, %v1052
        %v1059 = vpack.c.bf16 %v1055, %v1054
        %v1060 = vrot.slane %v1048, 7
        %v1061 = vrot.slane %v1049, 7
        %v1062 = vrot.slane %v1050, 7
        %v1063 = vrot.slane %v1051, 7
        %v1064 = vrot.slane %v1052, 7
        %v1065 = vrot.slane %v1053, 7
        %v1066 = vrot.slane %v1054, 7
        %v1067 = vrot.slane %v1055, 7
        %v1068 = vsel %vm586, %v1066, %v1067
        %v1069 = vsel %vm586, %v1065, %v1066
        %v1070 = vsel %vm586, %v1064, %v1065
        %v1071 = vsel %vm586, %v1063, %v1064
        %v1072 = vsel %vm586, %v1062, %v1063
        %v1073 = vsel %vm586, %v1061, %v1062
        %v1074 = vsel %vm586, %v1060, %v1061
        %v1075 = vsel %vm586, %v1067, %v1060
        %v1076 = vsel %vm558, 0.0, %v1075
        %v1077 = vsel %vm559, 0.0, %v1074
        %v1078 = vsel %vm560, 0.0, %v1073
        %v1079 = vsel %vm561, 0.0, %v1072
        %v1080 = vsel %vm562, 0.0, %v1071
        %v1081 = vsel %vm563, 0.0, %v1070
        %v1082 = vsel %vm564, 0.0, %v1069
        %v1083 = vsel %vm565, 0.0, %v1068
        %v1084 = vpack.c.bf16 %v1077, %v1076
        %v1085 = vpack.c.bf16 %v1079, %v1078
        %v1086 = vpack.c.bf16 %v1081, %v1080
        %v1087 = vpack.c.bf16 %v1083, %v1082
        %v1088 = vrot.slane %v1048, 1
        %v1089 = vrot.slane %v1049, 1
        %v1090 = vrot.slane %v1050, 1
        %v1091 = vrot.slane %v1051, 1
        %v1092 = vrot.slane %v1052, 1
        %v1093 = vrot.slane %v1053, 1
        %v1094 = vrot.slane %v1054, 1
        %v1095 = vrot.slane %v1055, 1
        %v1096 = vsel %vm615, %v1094, %v1095
        %v1097 = vsel %vm615, %v1093, %v1094
        %v1098 = vsel %vm615, %v1092, %v1093
        %v1099 = vsel %vm615, %v1091, %v1092
        %v1100 = vsel %vm615, %v1090, %v1091
        %v1101 = vsel %vm615, %v1089, %v1090
        %v1102 = vsel %vm615, %v1088, %v1089
        %v1103 = vsel %vm615, %v1095, %v1088
        %v1104 = vsel %vm566, 0.0, %v1102
        %v1105 = vsel %vm567, 0.0, %v1101
        %v1106 = vsel %vm568, 0.0, %v1100
        %v1107 = vsel %vm569, 0.0, %v1099
        %v1108 = vsel %vm570, 0.0, %v1098
        %v1109 = vsel %vm571, 0.0, %v1097
        %v1110 = vsel %vm572, 0.0, %v1096
        %v1111 = vsel %vm573, 0.0, %v1103
        %v1112 = vpack.c.bf16 %v1105, %v1104
        %v1113 = vpack.c.bf16 %v1107, %v1106
        %v1114 = vpack.c.bf16 %v1109, %v1108
        %v1115 = vpack.c.bf16 %v1111, %v1110
        %v1116 = vld [vmem:[#allocation8] sm:$0xf]
        %v1117 = vld [vmem:[#allocation8 + $0x4] sm:$0xf]
        %v1118 = vld [vmem:[#allocation8 + $0x8] sm:$0xf]
        %v1119 = vld [vmem:[#allocation8 + $0xc] sm:$0xf]
        %v1120 = vld [vmem:[#allocation8 + $0x10] sm:$0xf]
        %v1121 = vld [vmem:[#allocation8 + $0x14] sm:$0xf]
        %v1122 = vld [vmem:[#allocation8 + $0x18] sm:$0xf]
        %v1123 = vld [vmem:[#allocation8 + $0x1c] sm:$0xf]
        %v1124 = vld [vmem:[#allocation8 + $0x20] sm:$0xf]
        %v1125 = vld [vmem:[#allocation8 + $0x24] sm:$0xf]
        %v1126 = vld [vmem:[#allocation8 + $0x28] sm:$0xf]
        %v1127 = vld [vmem:[#allocation8 + $0x2c] sm:$0xf]
        %v1128 = vld [vmem:[#allocation8 + $0x30] sm:$0xf]
        %v1129 = vld [vmem:[#allocation8 + $0x34] sm:$0xf]
        %v1130 = vld [vmem:[#allocation8 + $0x38] sm:$0xf]
        %v1131 = vld [vmem:[#allocation8 + $0x3c] sm:$0xf]
        %s1132 = scalar_lea.vmem [#allocation8], 64
        %v1133 = vld [vmem:[%s1132] sm:$0xf]
        %v1134 = vld [vmem:[%s1132 + $0x4] sm:$0xf]
        %v1135 = vld [vmem:[%s1132 + $0x8] sm:$0xf]
        %v1136 = vld [vmem:[%s1132 + $0xc] sm:$0xf]
        %v1137 = vld [vmem:[%s1132 + $0x10] sm:$0xf]
        %v1138 = vld [vmem:[%s1132 + $0x14] sm:$0xf]
        %v1139 = vld [vmem:[%s1132 + $0x18] sm:$0xf]
        %v1140 = vld [vmem:[%s1132 + $0x1c] sm:$0xf]
        %v1141 = vld [vmem:[%s1132 + $0x20] sm:$0xf]
        %v1142 = vld [vmem:[%s1132 + $0x24] sm:$0xf]
        %v1143 = vld [vmem:[%s1132 + $0x28] sm:$0xf]
        %v1144 = vld [vmem:[%s1132 + $0x2c] sm:$0xf]
        %v1145 = vld [vmem:[%s1132 + $0x30] sm:$0xf]
        %v1146 = vld [vmem:[%s1132 + $0x34] sm:$0xf]
        %v1147 = vld [vmem:[%s1132 + $0x38] sm:$0xf]
        %v1148 = vld [vmem:[%s1132 + $0x3c] sm:$0xf]
        %v1165 = vunpack.c.l.b16 %v1133
        %v1166 = vunpack.c.l.b16 %v1134
        %v1167 = vunpack.c.l.b16 %v1135
        %v1168 = vunpack.c.l.b16 %v1136
        %v1169 = vunpack.c.l.b16 %v1137
        %v1170 = vunpack.c.l.b16 %v1138
        %v1171 = vunpack.c.l.b16 %v1139
        %v1172 = vunpack.c.l.b16 %v1140
        %v1173 = vunpack.c.l.b16 %v1141
        %v1174 = vunpack.c.l.b16 %v1142
        %v1175 = vunpack.c.l.b16 %v1143
        %v1176 = vunpack.c.l.b16 %v1144
        %v1177 = vunpack.c.l.b16 %v1145
        %v1178 = vunpack.c.l.b16 %v1146
        %v1179 = vunpack.c.l.b16 %v1147
        %v1180 = vunpack.c.l.b16 %v1148
        %v1181 = vpack.c.b16 %v1166, %v1165
        %v1182 = vpack.c.b16 %v1168, %v1167
        %v1183 = vpack.c.b16 %v1170, %v1169
        %v1184 = vpack.c.b16 %v1172, %v1171
        %v1185 = vpack.c.b16 %v1174, %v1173
        %v1186 = vpack.c.b16 %v1176, %v1175
        %v1187 = vpack.c.b16 %v1178, %v1177
        %v1188 = vpack.c.b16 %v1180, %v1179
        %1197 = vmatprep.subr.bf16.mxu0 0
        %1198 = vmatpush1.bf16.msra.mxu0 %v1181
        %1199 = vmatprep.subr.bf16.mxu0 0
        %1200 = vmatpush1.bf16.msra.mxu0 %v1182
        %1201 = vmatprep.subr.bf16.mxu0 0
        %1202 = vmatpush1.bf16.msra.mxu0 %v1183
        %1203 = vmatprep.subr.bf16.mxu0 0
        %1204 = vmatpush1.bf16.msra.mxu0 %v1184
        %1205 = vmatprep.subr.bf16.mxu0 0
        %1206 = vmatpush1.bf16.msra.mxu0 %v1185
        %1207 = vmatprep.subr.bf16.mxu0 0
        %1208 = vmatpush1.bf16.msra.mxu0 %v1186
        %1209 = vmatprep.subr.bf16.mxu0 0
        %1210 = vmatpush1.bf16.msra.mxu0 %v1187
        %1211 = vmatprep.subr.bf16.mxu0 0
        %1212 = vmatpush1.bf16.msra.mxu0 %v1188
        %1213 = vmatprep.subr.bf16.mxu0 0
        %1214 = vmatpush1.bf16.msra.mxu0 0
        %1215 = vmatprep.subr.bf16.mxu0 0
        %1216 = vmatpush1.bf16.msra.mxu0 0
        %1217 = vmatprep.subr.bf16.mxu0 0
        %1218 = vmatpush1.bf16.msra.mxu0 0
        %1219 = vmatprep.subr.bf16.mxu0 0
        %1220 = vmatpush1.bf16.msra.mxu0 0
        %1221 = vmatprep.subr.bf16.mxu0 0
        %1222 = vmatpush1.bf16.msra.mxu0 0
        %1223 = vmatprep.subr.bf16.mxu0 0
        %1224 = vmatpush1.bf16.msra.mxu0 0
        %1225 = vmatprep.subr.bf16.mxu0 0
        %1226 = vmatpush1.bf16.msra.mxu0 0
        %1227 = vmatprep.subr.bf16.mxu0 0
        %1228 = vmatpush1.bf16.msra.mxu0 0
        %1229 = vmatprep.mubr.bf16.mxu0 0
        %1230 = vmatmul.mubr.bf16.gmra.mrb[0].mxu0 %v1056
        %v1231 = vpop.f32.mrb[0].mxu0
        %v1232 = vadd.f32 0.0, %v1231
        %v1233 = vpop.f32.mrb[0].mxu0
        %v1234 = vpop.f32.mrb[0].mxu0
        %v1235 = vadd.f32 0.0, %v1234
        %v1236 = vpop.f32.mrb[0].mxu0
        %1237 = vmatprep.mubr.bf16.mxu0 0
        %1238 = vmatmul.mubr.bf16.gmra.mrb[0].mxu0 %v1057
        %v1239 = vpop.f32.mrb[0].mxu0
        %v1240 = vadd.f32 0.0, %v1239
        %v1241 = vpop.f32.mrb[0].mxu0
        %v1242 = vpop.f32.mrb[0].mxu0
        %v1243 = vadd.f32 0.0, %v1242
        %v1244 = vpop.f32.mrb[0].mxu0
        %1245 = vmatprep.mubr.bf16.mxu0 0
        %1246 = vmatmul.mubr.bf16.gmra.mrb[0].mxu0 %v1058
        %v1247 = vpop.f32.mrb[0].mxu0
        %v1248 = vadd.f32 0.0, %v1247
        %v1249 = vpop.f32.mrb[0].mxu0
        %v1250 = vpop.f32.mrb[0].mxu0
        %v1251 = vadd.f32 0.0, %v1250
        %v1252 = vpop.f32.mrb[0].mxu0
        %1253 = vmatprep.mubr.bf16.mxu0 0
        %1254 = vmatmul.mubr.bf16.gmra.mrb[0].mxu0 %v1059
        %v1255 = vpop.f32.mrb[0].mxu0
        %v1256 = vadd.f32 0.0, %v1255
        %v1257 = vpop.f32.mrb[0].mxu0
        %v1258 = vpop.f32.mrb[0].mxu0
        %v1259 = vadd.f32 0.0, %v1258
        %v1260 = vpop.f32.mrb[0].mxu0
        %1261 = vdwg.mxu0
        %v1278 = vunpack.c.l.b16 %v1116
        %v1279 = vunpack.c.l.b16 %v1117
        %v1280 = vunpack.c.l.b16 %v1118
        %v1281 = vunpack.c.l.b16 %v1119
        %v1282 = vunpack.c.l.b16 %v1120
        %v1283 = vunpack.c.l.b16 %v1121
        %v1284 = vunpack.c.l.b16 %v1122
        %v1285 = vunpack.c.l.b16 %v1123
        %v1286 = vunpack.c.l.b16 %v1124
        %v1287 = vunpack.c.l.b16 %v1125
        %v1288 = vunpack.c.l.b16 %v1126
        %v1289 = vunpack.c.l.b16 %v1127
        %v1290 = vunpack.c.l.b16 %v1128
        %v1291 = vunpack.c.l.b16 %v1129
        %v1292 = vunpack.c.l.b16 %v1130
        %v1293 = vunpack.c.l.b16 %v1131
        %v1294 = vpack.c.b16 %v1279, %v1278
        %v1295 = vpack.c.b16 %v1281, %v1280
        %v1296 = vpack.c.b16 %v1283, %v1282
        %v1297 = vpack.c.b16 %v1285, %v1284
        %v1298 = vpack.c.b16 %v1287, %v1286
        %v1299 = vpack.c.b16 %v1289, %v1288
        %v1300 = vpack.c.b16 %v1291, %v1290
        %v1301 = vpack.c.b16 %v1293, %v1292
        %1310 = vmatprep.subr.bf16.mxu0 0
        %1311 = vmatpush1.bf16.msra.mxu0 %v1294
        %1312 = vmatprep.subr.bf16.mxu0 0
        %1313 = vmatpush1.bf16.msra.mxu0 %v1295
        %1314 = vmatprep.subr.bf16.mxu0 0
        %1315 = vmatpush1.bf16.msra.mxu0 %v1296
        %1316 = vmatprep.subr.bf16.mxu0 0
        %1317 = vmatpush1.bf16.msra.mxu0 %v1297
        %1318 = vmatprep.subr.bf16.mxu0 0
        %1319 = vmatpush1.bf16.msra.mxu0 %v1298
        %1320 = vmatprep.subr.bf16.mxu0 0
        %1321 = vmatpush1.bf16.msra.mxu0 %v1299
        %1322 = vmatprep.subr.bf16.mxu0 0
        %1323 = vmatpush1.bf16.msra.mxu0 %v1300
        %1324 = vmatprep.subr.bf16.mxu0 0
        %1325 = vmatpush1.bf16.msra.mxu0 %v1301
        %1326 = vmatprep.subr.bf16.mxu0 0
        %1327 = vmatpush1.bf16.msra.mxu0 0
        %1328 = vmatprep.subr.bf16.mxu0 0
        %1329 = vmatpush1.bf16.msra.mxu0 0
        %1330 = vmatprep.subr.bf16.mxu0 0
        %1331 = vmatpush1.bf16.msra.mxu0 0
        %1332 = vmatprep.subr.bf16.mxu0 0
        %1333 = vmatpush1.bf16.msra.mxu0 0
        %1334 = vmatprep.subr.bf16.mxu0 0
        %1335 = vmatpush1.bf16.msra.mxu0 0
        %1336 = vmatprep.subr.bf16.mxu0 0
        %1337 = vmatpush1.bf16.msra.mxu0 0
        %1338 = vmatprep.subr.bf16.mxu0 0
        %1339 = vmatpush1.bf16.msra.mxu0 0
        %1340 = vmatprep.subr.bf16.mxu0 0
        %1341 = vmatpush1.bf16.msra.mxu0 0
        %1342 = vmatprep.mubr.bf16.mxu0 0
        %1343 = vmatmul.mubr.bf16.gmra.mrb[0].mxu0 %v1084
        %v1344 = vpop.f32.mrb[0].mxu0
        %v1345 = vadd.f32 %v1232, %v1344
        %v1346 = vpop.f32.mrb[0].mxu0
        %v1347 = vpop.f32.mrb[0].mxu0
        %v1348 = vadd.f32 %v1235, %v1347
        %v1349 = vpop.f32.mrb[0].mxu0
        %1350 = vmatprep.mubr.bf16.mxu0 0
        %1351 = vmatmul.mubr.bf16.gmra.mrb[0].mxu0 %v1085
        %v1352 = vpop.f32.mrb[0].mxu0
        %v1353 = vadd.f32 %v1240, %v1352
        %v1354 = vpop.f32.mrb[0].mxu0
        %v1355 = vpop.f32.mrb[0].mxu0
        %v1356 = vadd.f32 %v1243, %v1355
        %v1357 = vpop.f32.mrb[0].mxu0
        %1358 = vmatprep.mubr.bf16.mxu0 0
        %1359 = vmatmul.mubr.bf16.gmra.mrb[0].mxu0 %v1086
        %v1360 = vpop.f32.mrb[0].mxu0
        %v1361 = vadd.f32 %v1248, %v1360
        %v1362 = vpop.f32.mrb[0].mxu0
        %v1363 = vpop.f32.mrb[0].mxu0
        %v1364 = vadd.f32 %v1251, %v1363
        %v1365 = vpop.f32.mrb[0].mxu0
        %1366 = vmatprep.mubr.bf16.mxu0 0
        %1367 = vmatmul.mubr.bf16.gmra.mrb[0].mxu0 %v1087
        %v1368 = vpop.f32.mrb[0].mxu0
        %v1369 = vadd.f32 %v1256, %v1368
        %v1370 = vpop.f32.mrb[0].mxu0
        %v1371 = vpop.f32.mrb[0].mxu0
        %v1372 = vadd.f32 %v1259, %v1371
        %v1373 = vpop.f32.mrb[0].mxu0
        %1374 = vdwg.mxu0
        %s1375 = scalar_lea.vmem [#allocation8], 128
        %v1376 = vld [vmem:[%s1375] sm:$0xf]
        %v1377 = vld [vmem:[%s1375 + $0x4] sm:$0xf]
        %v1378 = vld [vmem:[%s1375 + $0x8] sm:$0xf]
        %v1379 = vld [vmem:[%s1375 + $0xc] sm:$0xf]
        %v1380 = vld [vmem:[%s1375 + $0x10] sm:$0xf]
        %v1381 = vld [vmem:[%s1375 + $0x14] sm:$0xf]
        %v1382 = vld [vmem:[%s1375 + $0x18] sm:$0xf]
        %v1383 = vld [vmem:[%s1375 + $0x1c] sm:$0xf]
        %v1384 = vld [vmem:[%s1375 + $0x20] sm:$0xf]
        %v1385 = vld [vmem:[%s1375 + $0x24] sm:$0xf]
        %v1386 = vld [vmem:[%s1375 + $0x28] sm:$0xf]
        %v1387 = vld [vmem:[%s1375 + $0x2c] sm:$0xf]
        %v1388 = vld [vmem:[%s1375 + $0x30] sm:$0xf]
        %v1389 = vld [vmem:[%s1375 + $0x34] sm:$0xf]
        %v1390 = vld [vmem:[%s1375 + $0x38] sm:$0xf]
        %v1391 = vld [vmem:[%s1375 + $0x3c] sm:$0xf]
        %v1408 = vunpack.c.l.b16 %v1376
        %v1409 = vunpack.c.l.b16 %v1377
        %v1410 = vunpack.c.l.b16 %v1378
        %v1411 = vunpack.c.l.b16 %v1379
        %v1412 = vunpack.c.l.b16 %v1380
        %v1413 = vunpack.c.l.b16 %v1381
        %v1414 = vunpack.c.l.b16 %v1382
        %v1415 = vunpack.c.l.b16 %v1383
        %v1416 = vunpack.c.l.b16 %v1384
        %v1417 = vunpack.c.l.b16 %v1385
        %v1418 = vunpack.c.l.b16 %v1386
        %v1419 = vunpack.c.l.b16 %v1387
        %v1420 = vunpack.c.l.b16 %v1388
        %v1421 = vunpack.c.l.b16 %v1389
        %v1422 = vunpack.c.l.b16 %v1390
        %v1423 = vunpack.c.l.b16 %v1391
        %v1424 = vpack.c.b16 %v1409, %v1408
        %v1425 = vpack.c.b16 %v1411, %v1410
        %v1426 = vpack.c.b16 %v1413, %v1412
        %v1427 = vpack.c.b16 %v1415, %v1414
        %v1428 = vpack.c.b16 %v1417, %v1416
        %v1429 = vpack.c.b16 %v1419, %v1418
        %v1430 = vpack.c.b16 %v1421, %v1420
        %v1431 = vpack.c.b16 %v1423, %v1422
        %1440 = vmatprep.subr.bf16.mxu0 0
        %1441 = vmatpush1.bf16.msra.mxu0 %v1424
        %1442 = vmatprep.subr.bf16.mxu0 0
        %1443 = vmatpush1.bf16.msra.mxu0 %v1425
        %1444 = vmatprep.subr.bf16.mxu0 0
        %1445 = vmatpush1.bf16.msra.mxu0 %v1426
        %1446 = vmatprep.subr.bf16.mxu0 0
        %1447 = vmatpush1.bf16.msra.mxu0 %v1427
        %1448 = vmatprep.subr.bf16.mxu0 0
        %1449 = vmatpush1.bf16.msra.mxu0 %v1428
        %1450 = vmatprep.subr.bf16.mxu0 0
        %1451 = vmatpush1.bf16.msra.mxu0 %v1429
        %1452 = vmatprep.subr.bf16.mxu0 0
        %1453 = vmatpush1.bf16.msra.mxu0 %v1430
        %1454 = vmatprep.subr.bf16.mxu0 0
        %1455 = vmatpush1.bf16.msra.mxu0 %v1431
        %1456 = vmatprep.subr.bf16.mxu0 0
        %1457 = vmatpush1.bf16.msra.mxu0 0
        %1458 = vmatprep.subr.bf16.mxu0 0
        %1459 = vmatpush1.bf16.msra.mxu0 0
        %1460 = vmatprep.subr.bf16.mxu0 0
        %1461 = vmatpush1.bf16.msra.mxu0 0
        %1462 = vmatprep.subr.bf16.mxu0 0
        %1463 = vmatpush1.bf16.msra.mxu0 0
        %1464 = vmatprep.subr.bf16.mxu0 0
        %1465 = vmatpush1.bf16.msra.mxu0 0
        %1466 = vmatprep.subr.bf16.mxu0 0
        %1467 = vmatpush1.bf16.msra.mxu0 0
        %1468 = vmatprep.subr.bf16.mxu0 0
        %1469 = vmatpush1.bf16.msra.mxu0 0
        %1470 = vmatprep.subr.bf16.mxu0 0
        %1471 = vmatpush1.bf16.msra.mxu0 0
        %1472 = vmatprep.mubr.bf16.mxu0 0
        %1473 = vmatmul.mubr.bf16.gmra.mrb[0].mxu0 %v1112
        %v1474 = vpop.f32.mrb[0].mxu0
        %v1475 = vadd.f32 0.0, %v1474
        %v1476 = vpop.f32.mrb[0].mxu0
        %v1477 = vpop.f32.mrb[0].mxu0
        %v1478 = vadd.f32 0.0, %v1477
        %v1479 = vpop.f32.mrb[0].mxu0
        %1480 = vmatprep.mubr.bf16.mxu0 0
        %1481 = vmatmul.mubr.bf16.gmra.mrb[0].mxu0 %v1113
        %v1482 = vpop.f32.mrb[0].mxu0
        %v1483 = vadd.f32 0.0, %v1482
        %v1484 = vpop.f32.mrb[0].mxu0
        %v1485 = vpop.f32.mrb[0].mxu0
        %v1486 = vadd.f32 0.0, %v1485
        %v1487 = vpop.f32.mrb[0].mxu0
        %1488 = vmatprep.mubr.bf16.mxu0 0
        %1489 = vmatmul.mubr.bf16.gmra.mrb[0].mxu0 %v1114
        %v1490 = vpop.f32.mrb[0].mxu0
        %v1491 = vadd.f32 0.0, %v1490
        %v1492 = vpop.f32.mrb[0].mxu0
        %v1493 = vpop.f32.mrb[0].mxu0
        %v1494 = vadd.f32 0.0, %v1493
        %v1495 = vpop.f32.mrb[0].mxu0
        %1496 = vmatprep.mubr.bf16.mxu0 0
        %1497 = vmatmul.mubr.bf16.gmra.mrb[0].mxu0 %v1115
        %v1498 = vpop.f32.mrb[0].mxu0
        %v1499 = vadd.f32 0.0, %v1498
        %v1500 = vpop.f32.mrb[0].mxu0
        %v1501 = vpop.f32.mrb[0].mxu0
        %v1502 = vadd.f32 0.0, %v1501
        %v1503 = vpop.f32.mrb[0].mxu0
        %1504 = vdwg.mxu0
        %v1505 = vadd.f32 %v1345, %v1475
        %v1506 = vadd.f32 %v1348, %v1478
        %v1507 = vadd.f32 %v1353, %v1483
        %v1508 = vadd.f32 %v1356, %v1486
        %v1509 = vadd.f32 %v1361, %v1491
        %v1510 = vadd.f32 %v1364, %v1494
        %v1511 = vadd.f32 %v1369, %v1499
        %v1512 = vadd.f32 %v1372, %v1502
        %v1513 = vadd.f32 %v463, %v1505
        %v1514 = vadd.f32 %v466, %v1506
        %v1515 = vadd.f32 %v471, %v1507
        %v1516 = vadd.f32 %v474, %v1508
        %v1517 = vadd.f32 %v479, %v1509
        %v1518 = vadd.f32 %v482, %v1510
        %v1519 = vadd.f32 %v487, %v1511
        %v1520 = vadd.f32 %v490, %v1512
        %v1521 = vld [vmem:[%s6] sm:$0x1]
        %v1523 = vlaneseq
        %v1524 = vshrl.u32 %v1523, 7
        %v1525 = vsub.s32 0, %v1524
        %v1526 = vrot.slane %v1521, %v1525
        %v1528 = vadd.f32 %v1513, %v1526
        %v1529 = vadd.f32 %v1514, %v1526
        %v1530 = vadd.f32 %v1515, %v1526
        %v1531 = vadd.f32 %v1516, %v1526
        %v1532 = vadd.f32 %v1517, %v1526
        %v1533 = vadd.f32 %v1518, %v1526
        %v1534 = vadd.f32 %v1519, %v1526
        %v1535 = vadd.f32 %v1520, %v1526
        %1536 = vst [vmem:[%s341] sm:$0xff] %v1528
        %1537 = vst [vmem:[%s341 + $0x8] sm:$0xff] %v1529
        %1538 = vst [vmem:[%s341 + $0x10] sm:$0xff] %v1530
        %1539 = vst [vmem:[%s341 + $0x18] sm:$0xff] %v1531
        %1540 = vst [vmem:[%s341 + $0x20] sm:$0xff] %v1532
        %1541 = vst [vmem:[%s341 + $0x28] sm:$0xff] %v1533
        %1542 = vst [vmem:[%s341 + $0x30] sm:$0xff] %v1534
        %1543 = vst [vmem:[%s341 + $0x38] sm:$0xff] %v1535
        %s1544 = sand.u32 %s186, 1
        %s1545 = scalar_lea.sflag [#allocation4], %s1544
        %s1546 = sand.u32 %s186, 1
        %s1547 = smul.addr %s1546, 64
        %s1548 = scalar_lea.vmem [#allocation10], %s1547
        // Predicated region
        $region65: #{tpu_custom_call.1} parent=47 // pred_check
          %p1549 = pneg %p196
        $region66: #{tpu_custom_call.1} parent=47 // pred_check_branch
          %1551 = sbr.rel (%p1549) target = $region68
        $region67: #{tpu_custom_call.1} parent=47 // pred_region
          %s1552 = smul.u32 4, %s26
          %s1554 = ssub.s32 1024, 1024
          %1555 = vsyncadd %s1545, %s1554
          %s1556 = smul.addr %s1552, 2
          %s1557 = smul.addr %s1556, 128
          %s1558 = scalar_lea.hbm %s7, %s1557
          %s1559 = sshll.u32 %s1548, 4
          %s1560 = int_to_ptr.vmem [resolvable:$true] %s1559
          %1565 = dma.vmem_to_hbm [thread:$0]  %s1560, 1024, %s1558, %s1545, 128, 128, 8
        $region68: #{tpu_custom_call.1} parent=47 // pred_fallthru
          _
      $region48: #{tpu_custom_call.1} parent=5 // pred_fallthru
        _
      %p1566 = scmp.le.s32.totalorder 2, %s21
      // Predicated region
      $region69: #{tpu_custom_call.1} parent=5 // pred_check
        %p1567 = pneg %p1566
      $region70: #{tpu_custom_call.1} parent=5 // pred_check_branch
        %1569 = sbr.rel (%p1567) target = $region72
      $region71: #{tpu_custom_call.1} parent=5 // pred_region
        %s1570 = ssub.s32 %s21, 2
        // Predicated region
        $region73: #{tpu_custom_call.1} parent=71 // pred_check
          %p1571 = pneg %p202
        $region74: #{tpu_custom_call.1} parent=71 // pred_check_branch
          %1573 = sbr.rel (%p1571) target = $region76
        $region75: #{tpu_custom_call.1} parent=71 // pred_region
          %s1574 = sand.u32 %s187, 1
          %s1575 = scalar_lea.sflag [#allocation4], %s1574
          %s1576 = sand.u32 %s187, 1
          %s1577 = smul.addr %s1576, 64
          %s1578 = scalar_lea.vmem [#allocation10], %s1577
          %1579 = dma.done %s1575, 1024
        $region76: #{tpu_custom_call.1} parent=71 // pred_fallthru
          _
      $region72: #{tpu_custom_call.1} parent=5 // pred_fallthru
        _
    $region6: #{tpu_custom_call.1} parent=1 // loop_footer
      %s25 = sadd.s32 1, %s21
    $region7: #{tpu_custom_call.1} parent=1 // loop_footer_branch
      %20 = sbr.rel target = $region3
    $region8: #{tpu_custom_call.1} parent=1 // loop_exit
      _
    %1580 = vsyncpa [#allocation3], 1
    %s1581 = scalar_lea.sflag [#allocation3], 1
    %1582 = vsyncpa %s1581, 1
    %1583 = vsyncpa [#allocation6], 1
    %1584 = vsyncpa [#allocation9], 1
    %1585 = vsyncpa [#allocation4], 1
    %s1586 = scalar_lea.sflag [#allocation4], 1
    %1587 = vsyncpa %s1586, 1

</llo_original>
